<compile_context>
chip_gen: v7x
topology: tpu7x:2x2x1
jax: 0.10.0
libtpu: 0.0.40
codegen_flags: <defaults>
</compile_context>

<pallas_src>
import functools

import jax
import jax.numpy as jnp
from jax.experimental import pallas as pl
from jax.experimental.pallas import tpu as pltpu


SEQ_LEN = 300                       # module default
SEQ_PAD = 384                       # 300 rounded up to a multiple of 128 (lane-dense)
LATENT = 32
W_LANES = 512                       # packed-weight slab lane width (max layer width)
B_ROWS = 16                         # packed-bias rows (11 layers, padded to sublane tile)
EPS_LANES = 128                     # epsilon padded to one lane-dense vreg width
HEAD_LANES = 128                    # fused mean|log_var head output width (lane-dense)

# --- packed weight slab layout -------------------------------------------------------
# Bands are contiguous row ranges of the slab; layers sharing a row count share a band
# at disjoint lane offsets.  Band order == order of first use (for streaming overlap).
_BAND_ROWS = [384, 256, 512, 512, 256, 128, 32, 256]
_BAND_OFF = [0]
for _r in _BAND_ROWS:
    _BAND_OFF.append(_BAND_OFF[-1] + _r)
R_TOTAL = _BAND_OFF[-1]             # 2336 rows (multiple of 16 -> bf16 tile aligned)
_BANDS = list(zip(_BAND_OFF[:-1], _BAND_ROWS))

# per kernel layer: (band, col_off, in_d, out_d, leaky_relu)
#   layer 5  = fused mean|log_var head (logical out 64, padded to 128 zero lanes)
#   layer 10 = final decoder linear, out padded 300 -> 384
_LAYER_DEFS = [
    (0, 0,   SEQ_PAD, 256, True),
    (1, 0,   256, 512, True),
    (2, 0,   512, 512, True),
    (3, 0,   512, 256, True),
    (4, 0,   256, 128, True),
    (5, 0,   128, 128, False),      # fused heads
    (6, 0,   32,  128, True),
    (5, 128, 128, 256, True),
    (7, 0,   256, 512, True),
    (3, 256, 512, 256, True),
    (4, 128, 256, SEQ_PAD, False),
]
_LAYERS = [(_BANDS[b][0], c, i, o, a) for (b, c, i, o, a) in _LAYER_DEFS]
_LAYER_BAND = [b for (b, _c, _i, _o, _a) in _LAYER_DEFS]

# --- packing-layout sanity checks (trace-time, cheap) ---------------------------------
_cols_per_band = {}
for (_b, _c, _i, _o, _a) in _LAYER_DEFS:
    assert _i == _BANDS[_b][1], "layer rows must equal its band rows"
    assert _c % 128 == 0 and _c + _o <= W_LANES
    for (lo, hi) in _cols_per_band.get(_b, []):
        assert _c + _o <= lo or _c >= hi, "lane ranges within a band must be disjoint"
    _cols_per_band.setdefault(_b, []).append((_c, _c + _o))
for (_r0, _rows) in _BANDS:
    assert _r0 % 16 == 0 and _rows % 16 == 0


def _use_bf16_activations():
    """bf16 VALU exists on v6e/v7x; keep activations in f32 on v5e and older."""
    try:
        kind = jax.devices()[0].device_kind.lower()
    except Exception:
        return False
    return not any(tag in kind for tag in ("v2", "v3", "v4", "v5"))


# ---------------------------------------------------------------------------
# Kernel: entire VAE forward (11 fused linears + LeakyReLU + reparameterization),
# with the weight slab streamed band-by-band from HBM while earlier layers compute.
# ---------------------------------------------------------------------------
def _vae_kernel(x_ref, eps_ref, w_hbm, b_ref, xhat_ref, head_ref, w_vmem, sems,
                *, bf16_act):
    # Issue every weight-band DMA up front; waits happen just-in-time per band below,
    # so the HBM->VMEM weight stream overlaps with the layer chain.
    for band, (r0, rows) in enumerate(_BANDS):
        pltpu.make_async_copy(w_hbm.at[r0:r0 + rows], w_vmem.at[r0:r0 + rows],
                              sems.at[band]).start()

    waited = set()                      # trace-time bookkeeping: wait each band once

    def wait_band(band):
        if band in waited:
            return
        waited.add(band)
        r0, rows = _BANDS[band]
        pltpu.make_async_copy(w_hbm.at[r0:r0 + rows], w_vmem.at[r0:r0 + rows],
                              sems.at[band]).wait()

    act_dtype = jnp.bfloat16 if bf16_act else jnp.float32

    def layer(h, idx):
        r0, c0, in_d, out_d, act = _LAYERS[idx]
        wait_band(_LAYER_BAND[idx])
        w = w_vmem[r0:r0 + in_d, c0:c0 + out_d]       # bf16, (16,128)-aligned slab view
        b = b_ref[idx:idx + 1, 0:out_d]               # f32 (1, out_d)
        y = jnp.dot(h.astype(jnp.bfloat16), w,
                    preferred_element_type=jnp.float32) + b
        if act:
            y = y.astype(act_dtype)
            y = jnp.maximum(y, 0.2 * y)               # LeakyReLU(0.2): slope in (0,1)
        return y

    # ----- encoder: 5 x (Linear -> LeakyReLU) -----
    h = x_ref[...]
    for i in range(5):
        h = layer(h, i)

    # ----- fused mean | log_var head: lanes 0:32 mean, 32:64 log_var, 64:128 zero -----
    head = layer(h, 5)                                # (TB, 128) f32, lane-dense output

    mean = head[:, :LATENT]
    log_var = head[:, LATENT:2 * LATENT]

    # Reparameterization — faithful to the PyTorch source (log_var used directly as std).
    z = mean + log_var * eps_ref[:, :LATENT]

    # ----- decoder: 4 x (Linear -> LeakyReLU) + final Linear -----
    d = z
    for i in range(6, 10):
        d = layer(d, i)
    x_hat = layer(d, 10)

    xhat_ref[...] = x_hat.astype(xhat_ref.dtype)
    head_ref[...] = head.astype(head_ref.dtype)


# ---------------------------------------------------------------------------
# Wrapper: batch-tiled grid, HBM-resident weight slab streamed via scratch,
# lane-dense padded I/O.  mean / log_var are sliced from the head block outside.
# ---------------------------------------------------------------------------
def vae_linear_medium_forward(x, eps, w_pack, b_pack):
    B, seq_len = x.shape
    assert seq_len == SEQ_LEN and eps.shape == (B, LATENT)
    assert w_pack.shape == (R_TOTAL, W_LANES) and b_pack.shape == (B_ROWS, W_LANES)

    # Batch tile: multiple of 8, capped at 512 (per perf review), minimal padding.
    B8 = ((B + 7) // 8) * 8
    n_tiles = max(1, -(-B8 // 512))
    TB = ((-(-B8 // n_tiles) + 7) // 8) * 8
    Bp = TB * n_tiles
    grid = (n_tiles,)

    x_p = jnp.zeros((Bp, SEQ_PAD), jnp.float32).at[:B, :SEQ_LEN].set(x)
    eps_p = jnp.zeros((Bp, EPS_LANES), jnp.float32).at[:B, :LATENT].set(eps)

    flops = 2 * Bp * sum(i * o for (_r, _c, i, o, _a) in _LAYERS)
    bytes_accessed = (R_TOTAL * W_LANES * 2             # bf16 weight slab
                      + B_ROWS * W_LANES * 4            # f32 biases
                      + Bp * SEQ_PAD * 4 * 2            # x + x_hat
                      + Bp * (EPS_LANES + HEAD_LANES) * 4)
    cost = pl.CostEstimate(flops=flops, transcendentals=0,
                           bytes_accessed=bytes_accessed)

    kernel = functools.partial(_vae_kernel, bf16_act=_use_bf16_activations())

    xhat_p, head_p = pl.pallas_call(
        kernel,
        out_shape=(jax.ShapeDtypeStruct((Bp, SEQ_PAD), jnp.float32),
                   jax.ShapeDtypeStruct((Bp, HEAD_LANES), jnp.float32)),
        grid_spec=pltpu.PrefetchScalarGridSpec(
            num_scalar_prefetch=0,
            grid=grid,
            in_specs=[
                pl.BlockSpec((TB, SEQ_PAD), lambda i: (i, 0)),        # x tile
                pl.BlockSpec((TB, EPS_LANES), lambda i: (i, 0)),      # eps tile (padded)
                pl.BlockSpec(memory_space=pl.ANY),                    # weight slab in HBM
                pl.BlockSpec((B_ROWS, W_LANES), lambda i: (0, 0)),    # biases (resident)
            ],
            out_specs=[
                pl.BlockSpec((TB, SEQ_PAD), lambda i: (i, 0)),        # x_hat (lane-dense)
                pl.BlockSpec((TB, HEAD_LANES), lambda i: (i, 0)),     # mean|log_var block
            ],
            scratch_shapes=[
                pltpu.VMEM((R_TOTAL, W_LANES), jnp.bfloat16),         # streamed weights
                pltpu.SemaphoreType.DMA((len(_BANDS),)),
            ],
        ),
        compiler_params=pltpu.CompilerParams(dimension_semantics=("parallel",)),
        cost_estimate=cost,
    )(x_p, eps_p, w_pack, b_pack)

    x_hat = xhat_p[:B, :SEQ_LEN]
    mean = head_p[:B, :LATENT]
    log_var = head_p[:B, LATENT:2 * LATENT]
    return x_hat, mean, log_var


# ---------------------------------------------------------------------------
# Parameter construction (nn.Linear-like, stored as (in, out)) + slab packing.
# ---------------------------------------------------------------------------
def make_torch_like_params(key, seq_len):
    dims = [(seq_len, 256), (256, 512), (512, 512), (512, 256), (256, 128),
            (128, 32), (128, 32),
            (32, 128), (128, 256), (256, 512), (512, 256), (256, seq_len)]
    params = []
    for fan_in, fan_out in dims:
        key, kw, kb = jax.random.split(key, 3)
        bound = 1.0 / (fan_in ** 0.5)
        w = jax.random.uniform(kw, (fan_in, fan_out), jnp.float32, -bound, bound)
        b = jax.random.uniform(kb, (fan_out,), jnp.float32, -bound, bound)
        params.append((w, b))
    return params


def pack_params(params, seq_len):
    """Pack 12 per-layer (w, b) into one bf16 weight slab + one f32 bias slab."""
    (w0, b0) = params[0]
    (wm, bm), (wv, bv) = params[5], params[6]
    (wL, bL) = params[11]

    w0p = jnp.zeros((SEQ_PAD, 256), jnp.float32).at[:seq_len].set(w0)       # pad seq in
    wh = jnp.concatenate([wm, wv], axis=1)                                  # (128, 64)
    bh = jnp.concatenate([bm, bv], axis=0)                                  # (64,)
    wLp = jnp.zeros((256, SEQ_PAD), jnp.float32).at[:, :seq_len].set(wL)    # pad seq out
    bLp = jnp.zeros((SEQ_PAD,), jnp.float32).at[:seq_len].set(bL)

    packed_layers = [
        (w0p, b0), params[1], params[2], params[3], params[4],
        (wh, bh),
        params[7], params[8], params[9], params[10], (wLp, bLp),
    ]

    w_pack = jnp.zeros((R_TOTAL, W_LANES), jnp.float32)
    b_pack = jnp.zeros((B_ROWS, W_LANES), jnp.float32)
    for idx, (w, b) in enumerate(packed_layers):
        r0, c0 = _LAYERS[idx][0], _LAYERS[idx][1]
        w_pack = w_pack.at[r0:r0 + w.shape[0], c0:c0 + w.shape[1]].set(w)
        b_pack = b_pack.at[idx, :b.shape[0]].set(b)
    return w_pack.astype(jnp.bfloat16), b_pack


# ---------------------------------------------------------------------------
# Pure-JAX reference (packing-independent): same bf16-input / f32-acc math and
# the same activation dtype as the kernel, so only MXU accumulation order differs.
# ---------------------------------------------------------------------------
def reference_forward(x, eps, params, bf16_act):
    act_dt = jnp.bfloat16 if bf16_act else jnp.float32

    def lin(h, w, b):
        return jnp.dot(h.astype(jnp.bfloat16), w.astype(jnp.bfloat16),
                       preferred_element_type=jnp.float32) + b

    def lrelu(h):
        h = h.astype(act_dt)
        return jnp.maximum(h, 0.2 * h)

    h = x
    for i in range(5):
        w, b = params[i]
        h = lrelu(lin(h, w, b))
    mean = lin(h, *params[5])
    log_var = lin(h, *params[6])
    z = mean + log_var * eps                 # faithful to the PyTorch source
    d = z
    for i in range(7, 11):
        w, b = params[i]
        d = lrelu(lin(d, w, b))
    x_hat = lin(d, *params[11])
    return x_hat, mean, log_var


if __name__ == "__main__":
    BATCH = 8

    key = jax.random.PRNGKey(0)
    k_params, k_x, k_eps = jax.random.split(key, 3)

    params = make_torch_like_params(k_params, SEQ_LEN)
    w_pack, b_pack = pack_params(params, SEQ_LEN)

    x = jax.random.normal(k_x, (BATCH, SEQ_LEN), jnp.float32)
    # epsilon ~ N(0,1): deterministic host-side stand-in for torch.randn_like
    eps = jax.random.normal(k_eps, (BATCH, LATENT), jnp.float32)

    x_hat, mean, log_var = jax.block_until_ready(
        vae_linear_medium_forward(x, eps, w_pack, b_pack)
    )

    # sanity check against the packing-independent pure-JAX reference (same bf16 math)
    r_xhat, r_mean, r_logvar = reference_forward(x, eps, params,
                                                 _use_bf16_activations())
    assert x_hat.shape == (BATCH, SEQ_LEN)
    assert mean.shape == (BATCH, LATENT) and log_var.shape == (BATCH, LATENT)
    assert jnp.allclose(mean, r_mean, atol=2e-2, rtol=2e-2)
    assert jnp.allclose(log_var, r_logvar, atol=2e-2, rtol=2e-2)
    assert jnp.allclose(x_hat, r_xhat, atol=2e-2, rtol=2e-2)

    print("KERNEL_OK")
</pallas_src>

<mosaic_0001>
module attributes {stable_mosaic.version = 11 : i64} {
  func.func @_vae_kernel(%arg0: i32, %arg1: memref<8x384xf32, #tpu.memory_space<vmem>>, %arg2: memref<8x128xf32, #tpu.memory_space<vmem>>, %arg3: memref<2336x512xbf16, #tpu.memory_space<any>>, %arg4: memref<16x512xf32, #tpu.memory_space<vmem>>, %arg5: memref<8x384xf32, #tpu.memory_space<vmem>>, %arg6: memref<8x128xf32, #tpu.memory_space<vmem>>, %arg7: memref<2336x512xbf16, #tpu.memory_space<vmem>>, %arg8: memref<8x!tpu.dma_semaphore, #tpu.memory_space<semaphore_mem>>) attributes {dimension_semantics = [#tpu.dimension_semantics<parallel>], iteration_bounds = array<i64: 1>, scalar_prefetch = 0 : i64, scratch_operands = 2 : i64, tpu.core_type = #tpu.core_type<tc>, window_params = [{transform_indices = @transform_0, window_bounds = array<i64: 8, 384>}, {transform_indices = @transform_1, window_bounds = array<i64: 8, 128>}, {}, {pipeline_mode = #tpu.pipeline_mode<synchronous>, transform_indices = @transform_3, window_bounds = array<i64: 16, 512>}, {transform_indices = @transform_4, window_bounds = array<i64: 8, 384>}, {transform_indices = @transform_5, window_bounds = array<i64: 8, 128>}]} {
    %c0_i32 = arith.constant 0 : i32
    %c0_i32_0 = arith.constant 0 : i32
    %c0_i32_1 = arith.constant 0 : i32
    %0 = tpu.memref_slice %arg3[%c0_i32_0, %c0_i32_1] : memref<2336x512xbf16, #tpu.memory_space<any>> -> memref<384x512xbf16, #tpu.memory_space<any>>
    %c0_i32_2 = arith.constant 0 : i32
    %c0_i32_3 = arith.constant 0 : i32
    %1 = tpu.memref_slice %arg7[%c0_i32_2, %c0_i32_3] : memref<2336x512xbf16, #tpu.memory_space<vmem>> -> memref<384x512xbf16, #tpu.memory_space<vmem>>
    %2 = tpu.memref_slice %arg8[%c0_i32] : memref<8x!tpu.dma_semaphore, #tpu.memory_space<semaphore_mem>> -> memref<1x!tpu.dma_semaphore, #tpu.memory_space<semaphore_mem>>
    %3 = tpu.memref_squeeze %2 : memref<1x!tpu.dma_semaphore, #tpu.memory_space<semaphore_mem>> -> memref<!tpu.dma_semaphore, #tpu.memory_space<semaphore_mem>>
    tpu.enqueue_dma source(%0 : memref<384x512xbf16, #tpu.memory_space<any>>) target(%1 : memref<384x512xbf16, #tpu.memory_space<vmem>>) target_semaphore(%3 : memref<!tpu.dma_semaphore, #tpu.memory_space<semaphore_mem>>)
    %c1_i32 = arith.constant 1 : i32
    %c384_i32 = arith.constant 384 : i32
    %c0_i32_4 = arith.constant 0 : i32
    %4 = tpu.memref_slice %arg3[%c384_i32, %c0_i32_4] : memref<2336x512xbf16, #tpu.memory_space<any>> -> memref<256x512xbf16, #tpu.memory_space<any>>
    %c384_i32_5 = arith.constant 384 : i32
    %c0_i32_6 = arith.constant 0 : i32
    %5 = tpu.memref_slice %arg7[%c384_i32_5, %c0_i32_6] : memref<2336x512xbf16, #tpu.memory_space<vmem>> -> memref<256x512xbf16, #tpu.memory_space<vmem>>
    %6 = tpu.memref_slice %arg8[%c1_i32] : memref<8x!tpu.dma_semaphore, #tpu.memory_space<semaphore_mem>> -> memref<1x!tpu.dma_semaphore, #tpu.memory_space<semaphore_mem>>
    %7 = tpu.memref_squeeze %6 : memref<1x!tpu.dma_semaphore, #tpu.memory_space<semaphore_mem>> -> memref<!tpu.dma_semaphore, #tpu.memory_space<semaphore_mem>>
    tpu.enqueue_dma source(%4 : memref<256x512xbf16, #tpu.memory_space<any>>) target(%5 : memref<256x512xbf16, #tpu.memory_space<vmem>>) target_semaphore(%7 : memref<!tpu.dma_semaphore, #tpu.memory_space<semaphore_mem>>)
    %c2_i32 = arith.constant 2 : i32
    %c640_i32 = arith.constant 640 : i32
    %c0_i32_7 = arith.constant 0 : i32
    %8 = tpu.memref_slice %arg3[%c640_i32, %c0_i32_7] : memref<2336x512xbf16, #tpu.memory_space<any>> -> memref<512x512xbf16, #tpu.memory_space<any>>
    %c640_i32_8 = arith.constant 640 : i32
    %c0_i32_9 = arith.constant 0 : i32
    %9 = tpu.memref_slice %arg7[%c640_i32_8, %c0_i32_9] : memref<2336x512xbf16, #tpu.memory_space<vmem>> -> memref<512x512xbf16, #tpu.memory_space<vmem>>
    %10 = tpu.memref_slice %arg8[%c2_i32] : memref<8x!tpu.dma_semaphore, #tpu.memory_space<semaphore_mem>> -> memref<1x!tpu.dma_semaphore, #tpu.memory_space<semaphore_mem>>
    %11 = tpu.memref_squeeze %10 : memref<1x!tpu.dma_semaphore, #tpu.memory_space<semaphore_mem>> -> memref<!tpu.dma_semaphore, #tpu.memory_space<semaphore_mem>>
    tpu.enqueue_dma source(%8 : memref<512x512xbf16, #tpu.memory_space<any>>) target(%9 : memref<512x512xbf16, #tpu.memory_space<vmem>>) target_semaphore(%11 : memref<!tpu.dma_semaphore, #tpu.memory_space<semaphore_mem>>)
    %c3_i32 = arith.constant 3 : i32
    %c1152_i32 = arith.constant 1152 : i32
    %c0_i32_10 = arith.constant 0 : i32
    %12 = tpu.memref_slice %arg3[%c1152_i32, %c0_i32_10] : memref<2336x512xbf16, #tpu.memory_space<any>> -> memref<512x512xbf16, #tpu.memory_space<any>>
    %c1152_i32_11 = arith.constant 1152 : i32
    %c0_i32_12 = arith.constant 0 : i32
    %13 = tpu.memref_slice %arg7[%c1152_i32_11, %c0_i32_12] : memref<2336x512xbf16, #tpu.memory_space<vmem>> -> memref<512x512xbf16, #tpu.memory_space<vmem>>
    %14 = tpu.memref_slice %arg8[%c3_i32] : memref<8x!tpu.dma_semaphore, #tpu.memory_space<semaphore_mem>> -> memref<1x!tpu.dma_semaphore, #tpu.memory_space<semaphore_mem>>
    %15 = tpu.memref_squeeze %14 : memref<1x!tpu.dma_semaphore, #tpu.memory_space<semaphore_mem>> -> memref<!tpu.dma_semaphore, #tpu.memory_space<semaphore_mem>>
    tpu.enqueue_dma source(%12 : memref<512x512xbf16, #tpu.memory_space<any>>) target(%13 : memref<512x512xbf16, #tpu.memory_space<vmem>>) target_semaphore(%15 : memref<!tpu.dma_semaphore, #tpu.memory_space<semaphore_mem>>)
    %c4_i32 = arith.constant 4 : i32
    %c1664_i32 = arith.constant 1664 : i32
    %c0_i32_13 = arith.constant 0 : i32
    %16 = tpu.memref_slice %arg3[%c1664_i32, %c0_i32_13] : memref<2336x512xbf16, #tpu.memory_space<any>> -> memref<256x512xbf16, #tpu.memory_space<any>>
    %c1664_i32_14 = arith.constant 1664 : i32
    %c0_i32_15 = arith.constant 0 : i32
    %17 = tpu.memref_slice %arg7[%c1664_i32_14, %c0_i32_15] : memref<2336x512xbf16, #tpu.memory_space<vmem>> -> memref<256x512xbf16, #tpu.memory_space<vmem>>
    %18 = tpu.memref_slice %arg8[%c4_i32] : memref<8x!tpu.dma_semaphore, #tpu.memory_space<semaphore_mem>> -> memref<1x!tpu.dma_semaphore, #tpu.memory_space<semaphore_mem>>
    %19 = tpu.memref_squeeze %18 : memref<1x!tpu.dma_semaphore, #tpu.memory_space<semaphore_mem>> -> memref<!tpu.dma_semaphore, #tpu.memory_space<semaphore_mem>>
    tpu.enqueue_dma source(%16 : memref<256x512xbf16, #tpu.memory_space<any>>) target(%17 : memref<256x512xbf16, #tpu.memory_space<vmem>>) target_semaphore(%19 : memref<!tpu.dma_semaphore, #tpu.memory_space<semaphore_mem>>)
    %c5_i32 = arith.constant 5 : i32
    %c1920_i32 = arith.constant 1920 : i32
    %c0_i32_16 = arith.constant 0 : i32
    %20 = tpu.memref_slice %arg3[%c1920_i32, %c0_i32_16] : memref<2336x512xbf16, #tpu.memory_space<any>> -> memref<128x512xbf16, #tpu.memory_space<any>>
    %c1920_i32_17 = arith.constant 1920 : i32
    %c0_i32_18 = arith.constant 0 : i32
    %21 = tpu.memref_slice %arg7[%c1920_i32_17, %c0_i32_18] : memref<2336x512xbf16, #tpu.memory_space<vmem>> -> memref<128x512xbf16, #tpu.memory_space<vmem>>
    %22 = tpu.memref_slice %arg8[%c5_i32] : memref<8x!tpu.dma_semaphore, #tpu.memory_space<semaphore_mem>> -> memref<1x!tpu.dma_semaphore, #tpu.memory_space<semaphore_mem>>
    %23 = tpu.memref_squeeze %22 : memref<1x!tpu.dma_semaphore, #tpu.memory_space<semaphore_mem>> -> memref<!tpu.dma_semaphore, #tpu.memory_space<semaphore_mem>>
    tpu.enqueue_dma source(%20 : memref<128x512xbf16, #tpu.memory_space<any>>) target(%21 : memref<128x512xbf16, #tpu.memory_space<vmem>>) target_semaphore(%23 : memref<!tpu.dma_semaphore, #tpu.memory_space<semaphore_mem>>)
    %c6_i32 = arith.constant 6 : i32
    %c2048_i32 = arith.constant 2048 : i32
    %c0_i32_19 = arith.constant 0 : i32
    %24 = tpu.memref_slice %arg3[%c2048_i32, %c0_i32_19] : memref<2336x512xbf16, #tpu.memory_space<any>> -> memref<32x512xbf16, #tpu.memory_space<any>>
    %c2048_i32_20 = arith.constant 2048 : i32
    %c0_i32_21 = arith.constant 0 : i32
    %25 = tpu.memref_slice %arg7[%c2048_i32_20, %c0_i32_21] : memref<2336x512xbf16, #tpu.memory_space<vmem>> -> memref<32x512xbf16, #tpu.memory_space<vmem>>
    %26 = tpu.memref_slice %arg8[%c6_i32] : memref<8x!tpu.dma_semaphore, #tpu.memory_space<semaphore_mem>> -> memref<1x!tpu.dma_semaphore, #tpu.memory_space<semaphore_mem>>
    %27 = tpu.memref_squeeze %26 : memref<1x!tpu.dma_semaphore, #tpu.memory_space<semaphore_mem>> -> memref<!tpu.dma_semaphore, #tpu.memory_space<semaphore_mem>>
    tpu.enqueue_dma source(%24 : memref<32x512xbf16, #tpu.memory_space<any>>) target(%25 : memref<32x512xbf16, #tpu.memory_space<vmem>>) target_semaphore(%27 : memref<!tpu.dma_semaphore, #tpu.memory_space<semaphore_mem>>)
    %c7_i32 = arith.constant 7 : i32
    %c2080_i32 = arith.constant 2080 : i32
    %c0_i32_22 = arith.constant 0 : i32
    %28 = tpu.memref_slice %arg3[%c2080_i32, %c0_i32_22] : memref<2336x512xbf16, #tpu.memory_space<any>> -> memref<256x512xbf16, #tpu.memory_space<any>>
    %c2080_i32_23 = arith.constant 2080 : i32
    %c0_i32_24 = arith.constant 0 : i32
    %29 = tpu.memref_slice %arg7[%c2080_i32_23, %c0_i32_24] : memref<2336x512xbf16, #tpu.memory_space<vmem>> -> memref<256x512xbf16, #tpu.memory_space<vmem>>
    %30 = tpu.memref_slice %arg8[%c7_i32] : memref<8x!tpu.dma_semaphore, #tpu.memory_space<semaphore_mem>> -> memref<1x!tpu.dma_semaphore, #tpu.memory_space<semaphore_mem>>
    %31 = tpu.memref_squeeze %30 : memref<1x!tpu.dma_semaphore, #tpu.memory_space<semaphore_mem>> -> memref<!tpu.dma_semaphore, #tpu.memory_space<semaphore_mem>>
    tpu.enqueue_dma source(%28 : memref<256x512xbf16, #tpu.memory_space<any>>) target(%29 : memref<256x512xbf16, #tpu.memory_space<vmem>>) target_semaphore(%31 : memref<!tpu.dma_semaphore, #tpu.memory_space<semaphore_mem>>)
    %c0 = arith.constant 0 : index
    %c0_25 = arith.constant 0 : index
    %32 = vector.load %arg1[%c0, %c0_25] : memref<8x384xf32, #tpu.memory_space<vmem>>, vector<8x384xf32>
    %c0_i32_26 = arith.constant 0 : i32
    %c0_i32_27 = arith.constant 0 : i32
    %c0_i32_28 = arith.constant 0 : i32
    %33 = tpu.memref_slice %arg3[%c0_i32_27, %c0_i32_28] : memref<2336x512xbf16, #tpu.memory_space<any>> -> memref<384x512xbf16, #tpu.memory_space<any>>
    %c0_i32_29 = arith.constant 0 : i32
    %c0_i32_30 = arith.constant 0 : i32
    %34 = tpu.memref_slice %arg7[%c0_i32_29, %c0_i32_30] : memref<2336x512xbf16, #tpu.memory_space<vmem>> -> memref<384x512xbf16, #tpu.memory_space<vmem>>
    %35 = tpu.memref_slice %arg8[%c0_i32_26] : memref<8x!tpu.dma_semaphore, #tpu.memory_space<semaphore_mem>> -> memref<1x!tpu.dma_semaphore, #tpu.memory_space<semaphore_mem>>
    %36 = tpu.memref_squeeze %35 : memref<1x!tpu.dma_semaphore, #tpu.memory_space<semaphore_mem>> -> memref<!tpu.dma_semaphore, #tpu.memory_space<semaphore_mem>>
    tpu.wait_dma2 semaphore(%36 : memref<!tpu.dma_semaphore, #tpu.memory_space<semaphore_mem>>) src(%33 : memref<384x512xbf16, #tpu.memory_space<any>>) dst(%34 : memref<384x512xbf16, #tpu.memory_space<vmem>>)
    %c0_31 = arith.constant 0 : index
    %c0_32 = arith.constant 0 : index
    %37 = vector.load %arg7[%c0_31, %c0_32] : memref<2336x512xbf16, #tpu.memory_space<vmem>>, vector<384x256xbf16>
    %c0_33 = arith.constant 0 : index
    %c0_34 = arith.constant 0 : index
    %38 = vector.load %arg4[%c0_33, %c0_34] : memref<16x512xf32, #tpu.memory_space<vmem>>, vector<1x256xf32>
    %39 = arith.truncf %32 : vector<8x384xf32> to vector<8x384xbf16>
    %cst = arith.constant dense<0.000000e+00> : vector<8x256xf32>
    %40 = tpu.matmul %39, %37, %cst {dimension_numbers = #tpu.dot_dimension_numbers<[1], [0], [0], [1], [0, 0, 1, 1], [], []>} : vector<8x384xbf16>, vector<384x256xbf16>, vector<8x256xf32> -> vector<8x256xf32>
    %41 = vector.broadcast %38 : vector<1x256xf32> to vector<8x256xf32>
    %42 = arith.addf %40, %41 : vector<8x256xf32>
    %43 = arith.truncf %42 : vector<8x256xf32> to vector<8x256xbf16>
    %cst_35 = arith.constant 2.001950e-01 : bf16
    %44 = vector.broadcast %cst_35 : bf16 to vector<8x256xbf16>
    %45 = arith.mulf %44, %43 : vector<8x256xbf16>
    %46 = arith.maximumf %43, %45 : vector<8x256xbf16>
    %c1_i32_36 = arith.constant 1 : i32
    %c384_i32_37 = arith.constant 384 : i32
    %c0_i32_38 = arith.constant 0 : i32
    %47 = tpu.memref_slice %arg3[%c384_i32_37, %c0_i32_38] : memref<2336x512xbf16, #tpu.memory_space<any>> -> memref<256x512xbf16, #tpu.memory_space<any>>
    %c384_i32_39 = arith.constant 384 : i32
    %c0_i32_40 = arith.constant 0 : i32
    %48 = tpu.memref_slice %arg7[%c384_i32_39, %c0_i32_40] : memref<2336x512xbf16, #tpu.memory_space<vmem>> -> memref<256x512xbf16, #tpu.memory_space<vmem>>
    %49 = tpu.memref_slice %arg8[%c1_i32_36] : memref<8x!tpu.dma_semaphore, #tpu.memory_space<semaphore_mem>> -> memref<1x!tpu.dma_semaphore, #tpu.memory_space<semaphore_mem>>
    %50 = tpu.memref_squeeze %49 : memref<1x!tpu.dma_semaphore, #tpu.memory_space<semaphore_mem>> -> memref<!tpu.dma_semaphore, #tpu.memory_space<semaphore_mem>>
    tpu.wait_dma2 semaphore(%50 : memref<!tpu.dma_semaphore, #tpu.memory_space<semaphore_mem>>) src(%47 : memref<256x512xbf16, #tpu.memory_space<any>>) dst(%48 : memref<256x512xbf16, #tpu.memory_space<vmem>>)
    %c384 = arith.constant 384 : index
    %c0_41 = arith.constant 0 : index
    %51 = vector.load %arg7[%c384, %c0_41] : memref<2336x512xbf16, #tpu.memory_space<vmem>>, vector<256x512xbf16>
    %c1 = arith.constant 1 : index
    %c0_42 = arith.constant 0 : index
    %52 = vector.load %arg4[%c1, %c0_42] : memref<16x512xf32, #tpu.memory_space<vmem>>, vector<1x512xf32>
    %cst_43 = arith.constant dense<0.000000e+00> : vector<8x512xf32>
    %53 = tpu.matmul %46, %51, %cst_43 {dimension_numbers = #tpu.dot_dimension_numbers<[1], [0], [0], [1], [0, 0, 1, 1], [], []>} : vector<8x256xbf16>, vector<256x512xbf16>, vector<8x512xf32> -> vector<8x512xf32>
    %54 = vector.broadcast %52 : vector<1x512xf32> to vector<8x512xf32>
    %55 = arith.addf %53, %54 : vector<8x512xf32>
    %56 = arith.truncf %55 : vector<8x512xf32> to vector<8x512xbf16>
    %cst_44 = arith.constant 2.001950e-01 : bf16
    %57 = vector.broadcast %cst_44 : bf16 to vector<8x512xbf16>
    %58 = arith.mulf %57, %56 : vector<8x512xbf16>
    %59 = arith.maximumf %56, %58 : vector<8x512xbf16>
    %c2_i32_45 = arith.constant 2 : i32
    %c640_i32_46 = arith.constant 640 : i32
    %c0_i32_47 = arith.constant 0 : i32
    %60 = tpu.memref_slice %arg3[%c640_i32_46, %c0_i32_47] : memref<2336x512xbf16, #tpu.memory_space<any>> -> memref<512x512xbf16, #tpu.memory_space<any>>
    %c640_i32_48 = arith.constant 640 : i32
    %c0_i32_49 = arith.constant 0 : i32
    %61 = tpu.memref_slice %arg7[%c640_i32_48, %c0_i32_49] : memref<2336x512xbf16, #tpu.memory_space<vmem>> -> memref<512x512xbf16, #tpu.memory_space<vmem>>
    %62 = tpu.memref_slice %arg8[%c2_i32_45] : memref<8x!tpu.dma_semaphore, #tpu.memory_space<semaphore_mem>> -> memref<1x!tpu.dma_semaphore, #tpu.memory_space<semaphore_mem>>
    %63 = tpu.memref_squeeze %62 : memref<1x!tpu.dma_semaphore, #tpu.memory_space<semaphore_mem>> -> memref<!tpu.dma_semaphore, #tpu.memory_space<semaphore_mem>>
    tpu.wait_dma2 semaphore(%63 : memref<!tpu.dma_semaphore, #tpu.memory_space<semaphore_mem>>) src(%60 : memref<512x512xbf16, #tpu.memory_space<any>>) dst(%61 : memref<512x512xbf16, #tpu.memory_space<vmem>>)
    %c640 = arith.constant 640 : index
    %c0_50 = arith.constant 0 : index
    %64 = vector.load %arg7[%c640, %c0_50] : memref<2336x512xbf16, #tpu.memory_space<vmem>>, vector<512x512xbf16>
    %c2 = arith.constant 2 : index
    %c0_51 = arith.constant 0 : index
    %65 = vector.load %arg4[%c2, %c0_51] : memref<16x512xf32, #tpu.memory_space<vmem>>, vector<1x512xf32>
    %cst_52 = arith.constant dense<0.000000e+00> : vector<8x512xf32>
    %66 = tpu.matmul %59, %64, %cst_52 {dimension_numbers = #tpu.dot_dimension_numbers<[1], [0], [0], [1], [0, 0, 1, 1], [], []>} : vector<8x512xbf16>, vector<512x512xbf16>, vector<8x512xf32> -> vector<8x512xf32>
    %67 = vector.broadcast %65 : vector<1x512xf32> to vector<8x512xf32>
    %68 = arith.addf %66, %67 : vector<8x512xf32>
    %69 = arith.truncf %68 : vector<8x512xf32> to vector<8x512xbf16>
    %cst_53 = arith.constant 2.001950e-01 : bf16
    %70 = vector.broadcast %cst_53 : bf16 to vector<8x512xbf16>
    %71 = arith.mulf %70, %69 : vector<8x512xbf16>
    %72 = arith.maximumf %69, %71 : vector<8x512xbf16>
    %c3_i32_54 = arith.constant 3 : i32
    %c1152_i32_55 = arith.constant 1152 : i32
    %c0_i32_56 = arith.constant 0 : i32
    %73 = tpu.memref_slice %arg3[%c1152_i32_55, %c0_i32_56] : memref<2336x512xbf16, #tpu.memory_space<any>> -> memref<512x512xbf16, #tpu.memory_space<any>>
    %c1152_i32_57 = arith.constant 1152 : i32
    %c0_i32_58 = arith.constant 0 : i32
    %74 = tpu.memref_slice %arg7[%c1152_i32_57, %c0_i32_58] : memref<2336x512xbf16, #tpu.memory_space<vmem>> -> memref<512x512xbf16, #tpu.memory_space<vmem>>
    %75 = tpu.memref_slice %arg8[%c3_i32_54] : memref<8x!tpu.dma_semaphore, #tpu.memory_space<semaphore_mem>> -> memref<1x!tpu.dma_semaphore, #tpu.memory_space<semaphore_mem>>
    %76 = tpu.memref_squeeze %75 : memref<1x!tpu.dma_semaphore, #tpu.memory_space<semaphore_mem>> -> memref<!tpu.dma_semaphore, #tpu.memory_space<semaphore_mem>>
    tpu.wait_dma2 semaphore(%76 : memref<!tpu.dma_semaphore, #tpu.memory_space<semaphore_mem>>) src(%73 : memref<512x512xbf16, #tpu.memory_space<any>>) dst(%74 : memref<512x512xbf16, #tpu.memory_space<vmem>>)
    %c1152 = arith.constant 1152 : index
    %c0_59 = arith.constant 0 : index
    %77 = vector.load %arg7[%c1152, %c0_59] : memref<2336x512xbf16, #tpu.memory_space<vmem>>, vector<512x256xbf16>
    %c3 = arith.constant 3 : index
    %c0_60 = arith.constant 0 : index
    %78 = vector.load %arg4[%c3, %c0_60] : memref<16x512xf32, #tpu.memory_space<vmem>>, vector<1x256xf32>
    %cst_61 = arith.constant dense<0.000000e+00> : vector<8x256xf32>
    %79 = tpu.matmul %72, %77, %cst_61 {dimension_numbers = #tpu.dot_dimension_numbers<[1], [0], [0], [1], [0, 0, 1, 1], [], []>} : vector<8x512xbf16>, vector<512x256xbf16>, vector<8x256xf32> -> vector<8x256xf32>
    %80 = vector.broadcast %78 : vector<1x256xf32> to vector<8x256xf32>
    %81 = arith.addf %79, %80 : vector<8x256xf32>
    %82 = arith.truncf %81 : vector<8x256xf32> to vector<8x256xbf16>
    %cst_62 = arith.constant 2.001950e-01 : bf16
    %83 = vector.broadcast %cst_62 : bf16 to vector<8x256xbf16>
    %84 = arith.mulf %83, %82 : vector<8x256xbf16>
    %85 = arith.maximumf %82, %84 : vector<8x256xbf16>
    %c4_i32_63 = arith.constant 4 : i32
    %c1664_i32_64 = arith.constant 1664 : i32
    %c0_i32_65 = arith.constant 0 : i32
    %86 = tpu.memref_slice %arg3[%c1664_i32_64, %c0_i32_65] : memref<2336x512xbf16, #tpu.memory_space<any>> -> memref<256x512xbf16, #tpu.memory_space<any>>
    %c1664_i32_66 = arith.constant 1664 : i32
    %c0_i32_67 = arith.constant 0 : i32
    %87 = tpu.memref_slice %arg7[%c1664_i32_66, %c0_i32_67] : memref<2336x512xbf16, #tpu.memory_space<vmem>> -> memref<256x512xbf16, #tpu.memory_space<vmem>>
    %88 = tpu.memref_slice %arg8[%c4_i32_63] : memref<8x!tpu.dma_semaphore, #tpu.memory_space<semaphore_mem>> -> memref<1x!tpu.dma_semaphore, #tpu.memory_space<semaphore_mem>>
    %89 = tpu.memref_squeeze %88 : memref<1x!tpu.dma_semaphore, #tpu.memory_space<semaphore_mem>> -> memref<!tpu.dma_semaphore, #tpu.memory_space<semaphore_mem>>
    tpu.wait_dma2 semaphore(%89 : memref<!tpu.dma_semaphore, #tpu.memory_space<semaphore_mem>>) src(%86 : memref<256x512xbf16, #tpu.memory_space<any>>) dst(%87 : memref<256x512xbf16, #tpu.memory_space<vmem>>)
    %c1664 = arith.constant 1664 : index
    %c0_68 = arith.constant 0 : index
    %90 = vector.load %arg7[%c1664, %c0_68] : memref<2336x512xbf16, #tpu.memory_space<vmem>>, vector<256x128xbf16>
    %c4 = arith.constant 4 : index
    %c0_69 = arith.constant 0 : index
    %91 = vector.load %arg4[%c4, %c0_69] : memref<16x512xf32, #tpu.memory_space<vmem>>, vector<1x128xf32>
    %cst_70 = arith.constant dense<0.000000e+00> : vector<8x128xf32>
    %92 = tpu.matmul %85, %90, %cst_70 {dimension_numbers = #tpu.dot_dimension_numbers<[1], [0], [0], [1], [0, 0, 1, 1], [], []>} : vector<8x256xbf16>, vector<256x128xbf16>, vector<8x128xf32> -> vector<8x128xf32>
    %93 = vector.broadcast %91 : vector<1x128xf32> to vector<8x128xf32>
    %94 = arith.addf %92, %93 : vector<8x128xf32>
    %95 = arith.truncf %94 : vector<8x128xf32> to vector<8x128xbf16>
    %cst_71 = arith.constant 2.001950e-01 : bf16
    %96 = vector.broadcast %cst_71 : bf16 to vector<8x128xbf16>
    %97 = arith.mulf %96, %95 : vector<8x128xbf16>
    %98 = arith.maximumf %95, %97 : vector<8x128xbf16>
    %c5_i32_72 = arith.constant 5 : i32
    %c1920_i32_73 = arith.constant 1920 : i32
    %c0_i32_74 = arith.constant 0 : i32
    %99 = tpu.memref_slice %arg3[%c1920_i32_73, %c0_i32_74] : memref<2336x512xbf16, #tpu.memory_space<any>> -> memref<128x512xbf16, #tpu.memory_space<any>>
    %c1920_i32_75 = arith.constant 1920 : i32
    %c0_i32_76 = arith.constant 0 : i32
    %100 = tpu.memref_slice %arg7[%c1920_i32_75, %c0_i32_76] : memref<2336x512xbf16, #tpu.memory_space<vmem>> -> memref<128x512xbf16, #tpu.memory_space<vmem>>
    %101 = tpu.memref_slice %arg8[%c5_i32_72] : memref<8x!tpu.dma_semaphore, #tpu.memory_space<semaphore_mem>> -> memref<1x!tpu.dma_semaphore, #tpu.memory_space<semaphore_mem>>
    %102 = tpu.memref_squeeze %101 : memref<1x!tpu.dma_semaphore, #tpu.memory_space<semaphore_mem>> -> memref<!tpu.dma_semaphore, #tpu.memory_space<semaphore_mem>>
    tpu.wait_dma2 semaphore(%102 : memref<!tpu.dma_semaphore, #tpu.memory_space<semaphore_mem>>) src(%99 : memref<128x512xbf16, #tpu.memory_space<any>>) dst(%100 : memref<128x512xbf16, #tpu.memory_space<vmem>>)
    %c1920 = arith.constant 1920 : index
    %c0_77 = arith.constant 0 : index
    %103 = vector.load %arg7[%c1920, %c0_77] : memref<2336x512xbf16, #tpu.memory_space<vmem>>, vector<128x128xbf16>
    %c5 = arith.constant 5 : index
    %c0_78 = arith.constant 0 : index
    %104 = vector.load %arg4[%c5, %c0_78] : memref<16x512xf32, #tpu.memory_space<vmem>>, vector<1x128xf32>
    %cst_79 = arith.constant dense<0.000000e+00> : vector<8x128xf32>
    %105 = tpu.matmul %98, %103, %cst_79 {dimension_numbers = #tpu.dot_dimension_numbers<[1], [0], [0], [1], [0, 0, 1, 1], [], []>} : vector<8x128xbf16>, vector<128x128xbf16>, vector<8x128xf32> -> vector<8x128xf32>
    %106 = vector.broadcast %104 : vector<1x128xf32> to vector<8x128xf32>
    %107 = arith.addf %105, %106 : vector<8x128xf32>
    %108 = vector.extract_strided_slice %107 {offsets = [0, 0], sizes = [8, 32], strides = [1, 1]} : vector<8x128xf32> to vector<8x32xf32>
    %109 = vector.extract_strided_slice %107 {offsets = [0, 32], sizes = [8, 32], strides = [1, 1]} : vector<8x128xf32> to vector<8x32xf32>
    %c0_80 = arith.constant 0 : index
    %c0_81 = arith.constant 0 : index
    %110 = vector.load %arg2[%c0_80, %c0_81] : memref<8x128xf32, #tpu.memory_space<vmem>>, vector<8x32xf32>
    %111 = arith.mulf %109, %110 : vector<8x32xf32>
    %112 = arith.addf %108, %111 : vector<8x32xf32>
    %c6_i32_82 = arith.constant 6 : i32
    %c2048_i32_83 = arith.constant 2048 : i32
    %c0_i32_84 = arith.constant 0 : i32
    %113 = tpu.memref_slice %arg3[%c2048_i32_83, %c0_i32_84] : memref<2336x512xbf16, #tpu.memory_space<any>> -> memref<32x512xbf16, #tpu.memory_space<any>>
    %c2048_i32_85 = arith.constant 2048 : i32
    %c0_i32_86 = arith.constant 0 : i32
    %114 = tpu.memref_slice %arg7[%c2048_i32_85, %c0_i32_86] : memref<2336x512xbf16, #tpu.memory_space<vmem>> -> memref<32x512xbf16, #tpu.memory_space<vmem>>
    %115 = tpu.memref_slice %arg8[%c6_i32_82] : memref<8x!tpu.dma_semaphore, #tpu.memory_space<semaphore_mem>> -> memref<1x!tpu.dma_semaphore, #tpu.memory_space<semaphore_mem>>
    %116 = tpu.memref_squeeze %115 : memref<1x!tpu.dma_semaphore, #tpu.memory_space<semaphore_mem>> -> memref<!tpu.dma_semaphore, #tpu.memory_space<semaphore_mem>>
    tpu.wait_dma2 semaphore(%116 : memref<!tpu.dma_semaphore, #tpu.memory_space<semaphore_mem>>) src(%113 : memref<32x512xbf16, #tpu.memory_space<any>>) dst(%114 : memref<32x512xbf16, #tpu.memory_space<vmem>>)
    %c2048 = arith.constant 2048 : index
    %c0_87 = arith.constant 0 : index
    %117 = vector.load %arg7[%c2048, %c0_87] : memref<2336x512xbf16, #tpu.memory_space<vmem>>, vector<32x128xbf16>
    %c6 = arith.constant 6 : index
    %c0_88 = arith.constant 0 : index
    %118 = vector.load %arg4[%c6, %c0_88] : memref<16x512xf32, #tpu.memory_space<vmem>>, vector<1x128xf32>
    %119 = arith.truncf %112 : vector<8x32xf32> to vector<8x32xbf16>
    %cst_89 = arith.constant dense<0.000000e+00> : vector<8x128xf32>
    %120 = tpu.matmul %119, %117, %cst_89 {dimension_numbers = #tpu.dot_dimension_numbers<[1], [0], [0], [1], [0, 0, 1, 1], [], []>} : vector<8x32xbf16>, vector<32x128xbf16>, vector<8x128xf32> -> vector<8x128xf32>
    %121 = vector.broadcast %118 : vector<1x128xf32> to vector<8x128xf32>
    %122 = arith.addf %120, %121 : vector<8x128xf32>
    %123 = arith.truncf %122 : vector<8x128xf32> to vector<8x128xbf16>
    %cst_90 = arith.constant 2.001950e-01 : bf16
    %124 = vector.broadcast %cst_90 : bf16 to vector<8x128xbf16>
    %125 = arith.mulf %124, %123 : vector<8x128xbf16>
    %126 = arith.maximumf %123, %125 : vector<8x128xbf16>
    %c1920_91 = arith.constant 1920 : index
    %c128 = arith.constant 128 : index
    %127 = vector.load %arg7[%c1920_91, %c128] : memref<2336x512xbf16, #tpu.memory_space<vmem>>, vector<128x256xbf16>
    %c7 = arith.constant 7 : index
    %c0_92 = arith.constant 0 : index
    %128 = vector.load %arg4[%c7, %c0_92] : memref<16x512xf32, #tpu.memory_space<vmem>>, vector<1x256xf32>
    %cst_93 = arith.constant dense<0.000000e+00> : vector<8x256xf32>
    %129 = tpu.matmul %126, %127, %cst_93 {dimension_numbers = #tpu.dot_dimension_numbers<[1], [0], [0], [1], [0, 0, 1, 1], [], []>} : vector<8x128xbf16>, vector<128x256xbf16>, vector<8x256xf32> -> vector<8x256xf32>
    %130 = vector.broadcast %128 : vector<1x256xf32> to vector<8x256xf32>
    %131 = arith.addf %129, %130 : vector<8x256xf32>
    %132 = arith.truncf %131 : vector<8x256xf32> to vector<8x256xbf16>
    %cst_94 = arith.constant 2.001950e-01 : bf16
    %133 = vector.broadcast %cst_94 : bf16 to vector<8x256xbf16>
    %134 = arith.mulf %133, %132 : vector<8x256xbf16>
    %135 = arith.maximumf %132, %134 : vector<8x256xbf16>
    %c7_i32_95 = arith.constant 7 : i32
    %c2080_i32_96 = arith.constant 2080 : i32
    %c0_i32_97 = arith.constant 0 : i32
    %136 = tpu.memref_slice %arg3[%c2080_i32_96, %c0_i32_97] : memref<2336x512xbf16, #tpu.memory_space<any>> -> memref<256x512xbf16, #tpu.memory_space<any>>
    %c2080_i32_98 = arith.constant 2080 : i32
    %c0_i32_99 = arith.constant 0 : i32
    %137 = tpu.memref_slice %arg7[%c2080_i32_98, %c0_i32_99] : memref<2336x512xbf16, #tpu.memory_space<vmem>> -> memref<256x512xbf16, #tpu.memory_space<vmem>>
    %138 = tpu.memref_slice %arg8[%c7_i32_95] : memref<8x!tpu.dma_semaphore, #tpu.memory_space<semaphore_mem>> -> memref<1x!tpu.dma_semaphore, #tpu.memory_space<semaphore_mem>>
    %139 = tpu.memref_squeeze %138 : memref<1x!tpu.dma_semaphore, #tpu.memory_space<semaphore_mem>> -> memref<!tpu.dma_semaphore, #tpu.memory_space<semaphore_mem>>
    tpu.wait_dma2 semaphore(%139 : memref<!tpu.dma_semaphore, #tpu.memory_space<semaphore_mem>>) src(%136 : memref<256x512xbf16, #tpu.memory_space<any>>) dst(%137 : memref<256x512xbf16, #tpu.memory_space<vmem>>)
    %c2080 = arith.constant 2080 : index
    %c0_100 = arith.constant 0 : index
    %140 = vector.load %arg7[%c2080, %c0_100] : memref<2336x512xbf16, #tpu.memory_space<vmem>>, vector<256x512xbf16>
    %c8 = arith.constant 8 : index
    %c0_101 = arith.constant 0 : index
    %141 = vector.load %arg4[%c8, %c0_101] : memref<16x512xf32, #tpu.memory_space<vmem>>, vector<1x512xf32>
    %cst_102 = arith.constant dense<0.000000e+00> : vector<8x512xf32>
    %142 = tpu.matmul %135, %140, %cst_102 {dimension_numbers = #tpu.dot_dimension_numbers<[1], [0], [0], [1], [0, 0, 1, 1], [], []>} : vector<8x256xbf16>, vector<256x512xbf16>, vector<8x512xf32> -> vector<8x512xf32>
    %143 = vector.broadcast %141 : vector<1x512xf32> to vector<8x512xf32>
    %144 = arith.addf %142, %143 : vector<8x512xf32>
    %145 = arith.truncf %144 : vector<8x512xf32> to vector<8x512xbf16>
    %cst_103 = arith.constant 2.001950e-01 : bf16
    %146 = vector.broadcast %cst_103 : bf16 to vector<8x512xbf16>
    %147 = arith.mulf %146, %145 : vector<8x512xbf16>
    %148 = arith.maximumf %145, %147 : vector<8x512xbf16>
    %c1152_104 = arith.constant 1152 : index
    %c256 = arith.constant 256 : index
    %149 = vector.load %arg7[%c1152_104, %c256] : memref<2336x512xbf16, #tpu.memory_space<vmem>>, vector<512x256xbf16>
    %c9 = arith.constant 9 : index
    %c0_105 = arith.constant 0 : index
    %150 = vector.load %arg4[%c9, %c0_105] : memref<16x512xf32, #tpu.memory_space<vmem>>, vector<1x256xf32>
    %cst_106 = arith.constant dense<0.000000e+00> : vector<8x256xf32>
    %151 = tpu.matmul %148, %149, %cst_106 {dimension_numbers = #tpu.dot_dimension_numbers<[1], [0], [0], [1], [0, 0, 1, 1], [], []>} : vector<8x512xbf16>, vector<512x256xbf16>, vector<8x256xf32> -> vector<8x256xf32>
    %152 = vector.broadcast %150 : vector<1x256xf32> to vector<8x256xf32>
    %153 = arith.addf %151, %152 : vector<8x256xf32>
    %154 = arith.truncf %153 : vector<8x256xf32> to vector<8x256xbf16>
    %cst_107 = arith.constant 2.001950e-01 : bf16
    %155 = vector.broadcast %cst_107 : bf16 to vector<8x256xbf16>
    %156 = arith.mulf %155, %154 : vector<8x256xbf16>
    %157 = arith.maximumf %154, %156 : vector<8x256xbf16>
    %c1664_108 = arith.constant 1664 : index
    %c128_109 = arith.constant 128 : index
    %158 = vector.load %arg7[%c1664_108, %c128_109] : memref<2336x512xbf16, #tpu.memory_space<vmem>>, vector<256x384xbf16>
    %c10 = arith.constant 10 : index
    %c0_110 = arith.constant 0 : index
    %159 = vector.load %arg4[%c10, %c0_110] : memref<16x512xf32, #tpu.memory_space<vmem>>, vector<1x384xf32>
    %cst_111 = arith.constant dense<0.000000e+00> : vector<8x384xf32>
    %160 = tpu.matmul %157, %158, %cst_111 {dimension_numbers = #tpu.dot_dimension_numbers<[1], [0], [0], [1], [0, 0, 1, 1], [], []>} : vector<8x256xbf16>, vector<256x384xbf16>, vector<8x384xf32> -> vector<8x384xf32>
    %161 = vector.broadcast %159 : vector<1x384xf32> to vector<8x384xf32>
    %162 = arith.addf %160, %161 : vector<8x384xf32>
    %c0_112 = arith.constant 0 : index
    %c0_113 = arith.constant 0 : index
    %163 = vector.load %arg5[%c0_112, %c0_113] : memref<8x384xf32, #tpu.memory_space<vmem>>, vector<8x384xf32>
    tpu.vector_store %arg5[%c0_112, %c0_113], %162 {strides = array<i32>} : memref<8x384xf32, #tpu.memory_space<vmem>>, vector<8x384xf32>,
    %c0_114 = arith.constant 0 : index
    %c0_115 = arith.constant 0 : index
    %164 = vector.load %arg6[%c0_114, %c0_115] : memref<8x128xf32, #tpu.memory_space<vmem>>, vector<8x128xf32>
    tpu.vector_store %arg6[%c0_114, %c0_115], %107 {strides = array<i32>} : memref<8x128xf32, #tpu.memory_space<vmem>>, vector<8x128xf32>,
    return
  }
  func.func @transform_0(%arg0: i32) -> (i32, i32) {
    %c0_i32 = arith.constant 0 : i32
    %c0_i32_0 = arith.constant 0 : i32
    return %arg0, %c0_i32 : i32, i32
  }
  func.func @transform_1(%arg0: i32) -> (i32, i32) {
    %c0_i32 = arith.constant 0 : i32
    %c0_i32_0 = arith.constant 0 : i32
    return %arg0, %c0_i32 : i32, i32
  }
  func.func @transform_3(%arg0: i32) -> (i32, i32) {
    %c0_i32 = arith.constant 0 : i32
    %c0_i32_0 = arith.constant 0 : i32
    %c0_i32_1 = arith.constant 0 : i32
    return %c0_i32, %c0_i32_0 : i32, i32
  }
  func.func @transform_4(%arg0: i32) -> (i32, i32) {
    %c0_i32 = arith.constant 0 : i32
    %c0_i32_0 = arith.constant 0 : i32
    return %arg0, %c0_i32 : i32, i32
  }
  func.func @transform_5(%arg0: i32) -> (i32, i32) {
    %c0_i32 = arith.constant 0 : i32
    %c0_i32_0 = arith.constant 0 : i32
    return %arg0, %c0_i32 : i32, i32
  }
}

</mosaic_0001>

<llo_original>
// kernel: tpu_custom_call.1
$region0: #{tpu_custom_call.1}
  #allocation0 [shape = 'u32[]', space=smem, size = 0x4, offset = 0x4, fixed_abs, tag = 'smem constant byte address 0x4 - core index']
  #allocation1 [shape = 'u32[144,128]{1,0:T(1,128)}', space=vmem, size = 0x12000, scoped, tag = 'internal scratch']
  #allocation2 [shape = 'bf16[2336,512]{1,0:T(16,128)(2,1)}', space=vmem, size = 0x248000, scoped, tag = 'scratch operand']
  #allocation3 [shape = 's32[8]{0}', space=sflag, size = 0x20, scoped, tag = 'scratch operand']
  #allocation13 [shape = 's32[]', space=sflag, size = 0x4, offset = 0, fixed_abs, tag = 'sflag constant byte address 0x0 - dummy sync flag']
  #allocation15 [shape = 's32[]', space=sflag, size = 0x4, offset = 0, fixed_abs, tag = 'sflag constant byte address 0x0 - dummy sync flag']
  #allocation17 [shape = 's32[]', space=sflag, size = 0x4, offset = 0, fixed_abs, tag = 'sflag constant byte address 0x0 - dummy sync flag']
  #allocation19 [shape = 's32[]', space=sflag, size = 0x4, offset = 0, fixed_abs, tag = 'sflag constant byte address 0x0 - dummy sync flag']
  #allocation21 [shape = 's32[]', space=sflag, size = 0x4, offset = 0, fixed_abs, tag = 'sflag constant byte address 0x0 - dummy sync flag']
  #allocation23 [shape = 's32[]', space=sflag, size = 0x4, offset = 0, fixed_abs, tag = 'sflag constant byte address 0x0 - dummy sync flag']
  #allocation25 [shape = 's32[]', space=sflag, size = 0x4, offset = 0, fixed_abs, tag = 'sflag constant byte address 0x0 - dummy sync flag']
  #allocation27 [shape = 's32[]', space=sflag, size = 0x4, offset = 0, fixed_abs, tag = 'sflag constant byte address 0x0 - dummy sync flag']
  %s0 = inlined_call_operand.hbm [shape: f32[8,384], index: 0, kind: input, shape index: {}]
  %s1 = inlined_call_operand.hbm [shape: f32[8,128], index: 1, kind: input, shape index: {}]
  %s2 = inlined_call_operand.hbm [shape: bf16[2336,512], index: 2, kind: input, shape index: {}]
  %s3 = inlined_call_operand.hbm [shape: f32[16,512], index: 3, kind: input, shape index: {}]
  %s4 = inlined_call_operand.hbm [shape: f32[8,384], index: 4, kind: output, shape index: {0}]
  %s5 = inlined_call_operand.hbm [shape: f32[8,128], index: 5, kind: output, shape index: {1}]
  %6 = xla_tuple %s4, %s5
  %s7 = sld [smem:[#allocation0]]
  $region42: #{tpu_custom_call.1} parent=0
    _
  %s9 = ssub.s32 1, %s7
  %s10 = scalar_select 0, %s9, %s7
  $region1: #{tpu_custom_call.1} parent=0
    #allocation4 [shape = 'u8[12288]{0}', space=vmem, size = 0x3000, scoped, tag = 'input window, operand 0, single buffered']
    #allocation5 [shape = 's32[1]{0}', space=sflag, size = 0x4, scoped, tag = 'scoped memory for tpu_custom_call.1']
    #allocation6 [shape = 's32[1]{0}', space=sflag, size = 0x4, scoped, tag = 'scoped memory for tpu_custom_call.1']
    #allocation7 [shape = 'u8[4096]{0}', space=vmem, size = 0x1000, scoped, tag = 'input window, operand 1, single buffered']
    #allocation8 [shape = 's32[1]{0}', space=sflag, size = 0x4, scoped, tag = 'scoped memory for tpu_custom_call.1']
    #allocation9 [shape = 'u8[32768]{0}', space=vmem, size = 0x8000, scoped, tag = 'input window, operand 3, single buffered']
    #allocation10 [shape = 'u8[12288]{0}', space=vmem, size = 0x3000, scoped, tag = 'output window, operand 0, single buffered']
    #allocation11 [shape = 'u8[4096]{0}', space=vmem, size = 0x1000, scoped, tag = 'output window, operand 1, single buffered']
    #allocation12 [shape = 's32[1]{0}', space=sflag, size = 0x4, scoped, tag = 'scoped memory for tpu_custom_call.1']
    #allocation14 [shape = 'u32[9]{0}', space=smem, size = 0x24, scoped, tag = 'DMA stride descriptor']
    #allocation16 [shape = 'u32[9]{0}', space=smem, size = 0x24, scoped, tag = 'DMA stride descriptor']
    #allocation18 [shape = 'u32[9]{0}', space=smem, size = 0x24, scoped, tag = 'DMA stride descriptor']
    #allocation20 [shape = 'u32[9]{0}', space=smem, size = 0x24, scoped, tag = 'DMA stride descriptor']
    #allocation22 [shape = 'u32[9]{0}', space=smem, size = 0x24, scoped, tag = 'DMA stride descriptor']
    #allocation24 [shape = 'u32[9]{0}', space=smem, size = 0x24, scoped, tag = 'DMA stride descriptor']
    #allocation26 [shape = 'u32[9]{0}', space=smem, size = 0x24, scoped, tag = 'DMA stride descriptor']
    #allocation28 [shape = 'u32[9]{0}', space=smem, size = 0x24, scoped, tag = 'DMA stride descriptor']
    %11 = vsyncpa [#allocation5], 0
    %12 = vsyncpa [#allocation8], 0
    %13 = vsyncpa [#allocation6], 0
    %14 = vsyncpa [#allocation12], 0
    // Predicated region
    $region2: #{tpu_custom_call.1} parent=1 // pred_check
      _
    $region3: #{tpu_custom_call.1} parent=1 // pred_check_branch
      %16 = sbr.rel (0) target = $region5
    $region4: #{tpu_custom_call.1} parent=1 // pred_region
      %s18 = ssub.s32 384, 384
      %19 = vsyncadd [#allocation5], %s18
      %s21 = sshll.u32 [#allocation4], 4
      %s22 = int_to_ptr.vmem [resolvable:$true] %s21
      %24 = dma.hbm_to_vmem [thread:$0]  %s0, 384, %s22, [#allocation5]
    $region5: #{tpu_custom_call.1} parent=1 // pred_fallthru
      _
    // Predicated region
    $region6: #{tpu_custom_call.1} parent=1 // pred_check
      _
    $region7: #{tpu_custom_call.1} parent=1 // pred_check_branch
      %26 = sbr.rel (0) target = $region9
    $region8: #{tpu_custom_call.1} parent=1 // pred_region
      %s28 = ssub.s32 128, 128
      %29 = vsyncadd [#allocation8], %s28
      %s31 = sshll.u32 [#allocation7], 4
      %s32 = int_to_ptr.vmem [resolvable:$true] %s31
      %34 = dma.hbm_to_vmem [thread:$0]  %s1, 128, %s32, [#allocation8]
    $region9: #{tpu_custom_call.1} parent=1 // pred_fallthru
      _
    // Predicated region
    $region10: #{tpu_custom_call.1} parent=1 // pred_check
      _
    $region11: #{tpu_custom_call.1} parent=1 // pred_check_branch
      %36 = sbr.rel (0) target = $region13
    $region12: #{tpu_custom_call.1} parent=1 // pred_region
      %s38 = ssub.s32 1024, 1024
      %39 = vsyncadd [#allocation8], %s38
      %s40 = sshll.u32 [#allocation9], 4
      %s41 = int_to_ptr.vmem [resolvable:$true] %s40
      %46 = dma.hbm_to_vmem [thread:$0]  %s3, 1024, %s41, [#allocation8], 512, 512, 32
    $region13: #{tpu_custom_call.1} parent=1 // pred_fallthru
      _
    // Predicated region
    $region14: #{tpu_custom_call.1} parent=1 // pred_check
      _
    $region15: #{tpu_custom_call.1} parent=1 // pred_check_branch
      %48 = sbr.rel (0) target = $region17
    $region16: #{tpu_custom_call.1} parent=1 // pred_region
      %49 = dma.done [#allocation5], 384
    $region17: #{tpu_custom_call.1} parent=1 // pred_fallthru
      _
    // Predicated region
    $region18: #{tpu_custom_call.1} parent=1 // pred_check
      _
    $region19: #{tpu_custom_call.1} parent=1 // pred_check_branch
      %51 = sbr.rel (0) target = $region21
    $region20: #{tpu_custom_call.1} parent=1 // pred_region
      %52 = dma.done [#allocation8], 128
    $region21: #{tpu_custom_call.1} parent=1 // pred_fallthru
      _
    // Predicated region
    $region22: #{tpu_custom_call.1} parent=1 // pred_check
      _
    $region23: #{tpu_custom_call.1} parent=1 // pred_check_branch
      %54 = sbr.rel (0) target = $region25
    $region24: #{tpu_custom_call.1} parent=1 // pred_region
      %55 = dma.done [#allocation8], 1024
    $region25: #{tpu_custom_call.1} parent=1 // pred_fallthru
      _
    %s59 = sshll.u32 1, 14
    %s60 = sxor.u32 4294967295, %s59
    %s62 = sld [smem:[#allocation0]]
    %s63 = sadd.s32 2, %s62
    %s65 = sshll.u32 7, 26
    %s66 = sxor.u32 4294967295, %s65
    %s67 = sand.u32 0, %s66
    %s68 = sshll.u32 %s63, 26
    %s69 = sor.u32 %s67, %s68
    %s70 = sshll.u32 [#allocation2], 4
    %s71 = int_to_ptr.vmem [resolvable:$true] %s70
    %74 = sst [smem:[#allocation14]] 512
    %s75 = scalar_lea.smem [#allocation14], 1
    %76 = sst [smem:[%s75]] 512
    %s77 = scalar_lea.smem [#allocation14], 2
    %78 = sst [smem:[%s77]] 4
    %s79 = scalar_lea.smem [#allocation14], 3
    %80 = sst [smem:[%s79]] 64
    %s81 = scalar_lea.smem [#allocation14], 4
    %82 = sst [smem:[%s81]] 128
    %s83 = scalar_lea.smem [#allocation14], 5
    %84 = sst [smem:[%s83]] 2
    %s85 = scalar_lea.smem [#allocation14], 6
    %86 = sst [smem:[%s85]] 256
    %s87 = scalar_lea.smem [#allocation14], 7
    %88 = sst [smem:[%s87]] 64
    %s89 = scalar_lea.smem [#allocation14], 8
    %90 = sst [smem:[%s89]] 4
    %92 = dma.general %s2, 12288, %s71, [#allocation3], [#allocation13], [#allocation14], %s69, 0
    %s93 = scalar_lea.hbm %s2, 12288
    %s94 = scalar_lea.vmem [#allocation2], 768
    %s95 = scalar_lea.sflag [#allocation3], 1
    %s97 = sshll.u32 1, 14
    %s98 = sxor.u32 4294967295, %s97
    %s100 = sadd.s32 2, %s62
    %s102 = sshll.u32 7, 26
    %s103 = sxor.u32 4294967295, %s102
    %s104 = sand.u32 0, %s103
    %s105 = sshll.u32 %s100, 26
    %s106 = sor.u32 %s104, %s105
    %s107 = sshll.u32 %s94, 4
    %s108 = int_to_ptr.vmem [resolvable:$true] %s107
    %111 = sst [smem:[#allocation16]] 512
    %s112 = scalar_lea.smem [#allocation16], 1
    %113 = sst [smem:[%s112]] 512
    %s114 = scalar_lea.smem [#allocation16], 2
    %115 = sst [smem:[%s114]] 4
    %s116 = scalar_lea.smem [#allocation16], 3
    %117 = sst [smem:[%s116]] 64
    %s118 = scalar_lea.smem [#allocation16], 4
    %119 = sst [smem:[%s118]] 128
    %s120 = scalar_lea.smem [#allocation16], 5
    %121 = sst [smem:[%s120]] 2
    %s122 = scalar_lea.smem [#allocation16], 6
    %123 = sst [smem:[%s122]] 256
    %s124 = scalar_lea.smem [#allocation16], 7
    %125 = sst [smem:[%s124]] 64
    %s126 = scalar_lea.smem [#allocation16], 8
    %127 = sst [smem:[%s126]] 4
    %129 = dma.general %s93, 8192, %s108, %s95, [#allocation15], [#allocation16], %s106, 0
    %s130 = scalar_lea.hbm %s2, 20480
    %s131 = scalar_lea.vmem [#allocation2], 1280
    %s132 = scalar_lea.sflag [#allocation3], 2
    %s134 = sshll.u32 1, 14
    %s135 = sxor.u32 4294967295, %s134
    %s137 = sadd.s32 2, %s62
    %s139 = sshll.u32 7, 26
    %s140 = sxor.u32 4294967295, %s139
    %s141 = sand.u32 0, %s140
    %s142 = sshll.u32 %s137, 26
    %s143 = sor.u32 %s141, %s142
    %s144 = sshll.u32 %s131, 4
    %s145 = int_to_ptr.vmem [resolvable:$true] %s144
    %148 = sst [smem:[#allocation18]] 512
    %s149 = scalar_lea.smem [#allocation18], 1
    %150 = sst [smem:[%s149]] 512
    %s151 = scalar_lea.smem [#allocation18], 2
    %152 = sst [smem:[%s151]] 4
    %s153 = scalar_lea.smem [#allocation18], 3
    %154 = sst [smem:[%s153]] 64
    %s155 = scalar_lea.smem [#allocation18], 4
    %156 = sst [smem:[%s155]] 128
    %s157 = scalar_lea.smem [#allocation18], 5
    %158 = sst [smem:[%s157]] 2
    %s159 = scalar_lea.smem [#allocation18], 6
    %160 = sst [smem:[%s159]] 256
    %s161 = scalar_lea.smem [#allocation18], 7
    %162 = sst [smem:[%s161]] 64
    %s163 = scalar_lea.smem [#allocation18], 8
    %164 = sst [smem:[%s163]] 4
    %166 = dma.general %s130, 16384, %s145, %s132, [#allocation17], [#allocation18], %s143, 0
    %s167 = scalar_lea.hbm %s2, 36864
    %s168 = scalar_lea.vmem [#allocation2], 2304
    %s169 = scalar_lea.sflag [#allocation3], 3
    %s171 = sshll.u32 1, 14
    %s172 = sxor.u32 4294967295, %s171
    %s174 = sadd.s32 2, %s62
    %s176 = sshll.u32 7, 26
    %s177 = sxor.u32 4294967295, %s176
    %s178 = sand.u32 0, %s177
    %s179 = sshll.u32 %s174, 26
    %s180 = sor.u32 %s178, %s179
    %s181 = sshll.u32 %s168, 4
    %s182 = int_to_ptr.vmem [resolvable:$true] %s181
    %185 = sst [smem:[#allocation20]] 512
    %s186 = scalar_lea.smem [#allocation20], 1
    %187 = sst [smem:[%s186]] 512
    %s188 = scalar_lea.smem [#allocation20], 2
    %189 = sst [smem:[%s188]] 4
    %s190 = scalar_lea.smem [#allocation20], 3
    %191 = sst [smem:[%s190]] 64
    %s192 = scalar_lea.smem [#allocation20], 4
    %193 = sst [smem:[%s192]] 128
    %s194 = scalar_lea.smem [#allocation20], 5
    %195 = sst [smem:[%s194]] 2
    %s196 = scalar_lea.smem [#allocation20], 6
    %197 = sst [smem:[%s196]] 256
    %s198 = scalar_lea.smem [#allocation20], 7
    %199 = sst [smem:[%s198]] 64
    %s200 = scalar_lea.smem [#allocation20], 8
    %201 = sst [smem:[%s200]] 4
    %203 = dma.general %s167, 16384, %s182, %s169, [#allocation19], [#allocation20], %s180, 0
    %s204 = scalar_lea.hbm %s2, 53248
    %s205 = scalar_lea.vmem [#allocation2], 3328
    %s206 = scalar_lea.sflag [#allocation3], 4
    %s208 = sshll.u32 1, 14
    %s209 = sxor.u32 4294967295, %s208
    %s211 = sadd.s32 2, %s62
    %s213 = sshll.u32 7, 26
    %s214 = sxor.u32 4294967295, %s213
    %s215 = sand.u32 0, %s214
    %s216 = sshll.u32 %s211, 26
    %s217 = sor.u32 %s215, %s216
    %s218 = sshll.u32 %s205, 4
    %s219 = int_to_ptr.vmem [resolvable:$true] %s218
    %222 = sst [smem:[#allocation22]] 512
    %s223 = scalar_lea.smem [#allocation22], 1
    %224 = sst [smem:[%s223]] 512
    %s225 = scalar_lea.smem [#allocation22], 2
    %226 = sst [smem:[%s225]] 4
    %s227 = scalar_lea.smem [#allocation22], 3
    %228 = sst [smem:[%s227]] 64
    %s229 = scalar_lea.smem [#allocation22], 4
    %230 = sst [smem:[%s229]] 128
    %s231 = scalar_lea.smem [#allocation22], 5
    %232 = sst [smem:[%s231]] 2
    %s233 = scalar_lea.smem [#allocation22], 6
    %234 = sst [smem:[%s233]] 256
    %s235 = scalar_lea.smem [#allocation22], 7
    %236 = sst [smem:[%s235]] 64
    %s237 = scalar_lea.smem [#allocation22], 8
    %238 = sst [smem:[%s237]] 4
    %240 = dma.general %s204, 8192, %s219, %s206, [#allocation21], [#allocation22], %s217, 0
    %s241 = scalar_lea.hbm %s2, 61440
    %s242 = scalar_lea.vmem [#allocation2], 3840
    %s243 = scalar_lea.sflag [#allocation3], 5
    %s245 = sshll.u32 1, 14
    %s246 = sxor.u32 4294967295, %s245
    %s248 = sadd.s32 2, %s62
    %s250 = sshll.u32 7, 26
    %s251 = sxor.u32 4294967295, %s250
    %s252 = sand.u32 0, %s251
    %s253 = sshll.u32 %s248, 26
    %s254 = sor.u32 %s252, %s253
    %s255 = sshll.u32 %s242, 4
    %s256 = int_to_ptr.vmem [resolvable:$true] %s255
    %259 = sst [smem:[#allocation24]] 512
    %s260 = scalar_lea.smem [#allocation24], 1
    %261 = sst [smem:[%s260]] 512
    %s262 = scalar_lea.smem [#allocation24], 2
    %263 = sst [smem:[%s262]] 4
    %s264 = scalar_lea.smem [#allocation24], 3
    %265 = sst [smem:[%s264]] 64
    %s266 = scalar_lea.smem [#allocation24], 4
    %267 = sst [smem:[%s266]] 128
    %s268 = scalar_lea.smem [#allocation24], 5
    %269 = sst [smem:[%s268]] 2
    %s270 = scalar_lea.smem [#allocation24], 6
    %271 = sst [smem:[%s270]] 256
    %s272 = scalar_lea.smem [#allocation24], 7
    %273 = sst [smem:[%s272]] 64
    %s274 = scalar_lea.smem [#allocation24], 8
    %275 = sst [smem:[%s274]] 4
    %277 = dma.general %s241, 4096, %s256, %s243, [#allocation23], [#allocation24], %s254, 0
    %s278 = scalar_lea.hbm %s2, 65536
    %s279 = scalar_lea.vmem [#allocation2], 4096
    %s280 = scalar_lea.sflag [#allocation3], 6
    %s282 = sshll.u32 1, 14
    %s283 = sxor.u32 4294967295, %s282
    %s285 = sadd.s32 2, %s62
    %s287 = sshll.u32 7, 26
    %s288 = sxor.u32 4294967295, %s287
    %s289 = sand.u32 0, %s288
    %s290 = sshll.u32 %s285, 26
    %s291 = sor.u32 %s289, %s290
    %s292 = sshll.u32 %s279, 4
    %s293 = int_to_ptr.vmem [resolvable:$true] %s292
    %296 = sst [smem:[#allocation26]] 512
    %s297 = scalar_lea.smem [#allocation26], 1
    %298 = sst [smem:[%s297]] 512
    %s299 = scalar_lea.smem [#allocation26], 2
    %300 = sst [smem:[%s299]] 4
    %s301 = scalar_lea.smem [#allocation26], 3
    %302 = sst [smem:[%s301]] 64
    %s303 = scalar_lea.smem [#allocation26], 4
    %304 = sst [smem:[%s303]] 128
    %s305 = scalar_lea.smem [#allocation26], 5
    %306 = sst [smem:[%s305]] 2
    %s307 = scalar_lea.smem [#allocation26], 6
    %308 = sst [smem:[%s307]] 256
    %s309 = scalar_lea.smem [#allocation26], 7
    %310 = sst [smem:[%s309]] 64
    %s311 = scalar_lea.smem [#allocation26], 8
    %312 = sst [smem:[%s311]] 4
    %314 = dma.general %s278, 1024, %s293, %s280, [#allocation25], [#allocation26], %s291, 0
    %s315 = scalar_lea.hbm %s2, 66560
    %s316 = scalar_lea.vmem [#allocation2], 4160
    %s317 = scalar_lea.sflag [#allocation3], 7
    %s319 = sshll.u32 1, 14
    %s320 = sxor.u32 4294967295, %s319
    %s322 = sadd.s32 2, %s62
    %s324 = sshll.u32 7, 26
    %s325 = sxor.u32 4294967295, %s324
    %s326 = sand.u32 0, %s325
    %s327 = sshll.u32 %s322, 26
    %s328 = sor.u32 %s326, %s327
    %s329 = sshll.u32 %s316, 4
    %s330 = int_to_ptr.vmem [resolvable:$true] %s329
    %333 = sst [smem:[#allocation28]] 512
    %s334 = scalar_lea.smem [#allocation28], 1
    %335 = sst [smem:[%s334]] 512
    %s336 = scalar_lea.smem [#allocation28], 2
    %337 = sst [smem:[%s336]] 4
    %s338 = scalar_lea.smem [#allocation28], 3
    %339 = sst [smem:[%s338]] 64
    %s340 = scalar_lea.smem [#allocation28], 4
    %341 = sst [smem:[%s340]] 128
    %s342 = scalar_lea.smem [#allocation28], 5
    %343 = sst [smem:[%s342]] 2
    %s344 = scalar_lea.smem [#allocation28], 6
    %345 = sst [smem:[%s344]] 256
    %s346 = scalar_lea.smem [#allocation28], 7
    %347 = sst [smem:[%s346]] 64
    %s348 = scalar_lea.smem [#allocation28], 8
    %349 = sst [smem:[%s348]] 4
    %351 = dma.general %s315, 8192, %s330, %s317, [#allocation27], [#allocation28], %s328, 0
    %v352 = vld [vmem:[#allocation4] sm:$0xff]
    %v353 = vld [vmem:[#allocation4 + $0x8] sm:$0xff]
    %v354 = vld [vmem:[#allocation4 + $0x10] sm:$0xff]
    %s355 = smul.u32 4, 48
    %s356 = smul.u32 %s355, 4
    %s357 = sshll.u32 %s356, 4
    %358 = dma.done [#allocation3], %s357
    %v359 = vld [vmem:[#allocation2] sm:$0xff]
    %v360 = vld [vmem:[#allocation2 + $0x8] sm:$0xff]
    %v361 = vld [vmem:[#allocation2 + $0x20] sm:$0xff]
    %v362 = vld [vmem:[#allocation2 + $0x28] sm:$0xff]
    %v363 = vld [vmem:[#allocation2 + $0x40] sm:$0xff]
    %v364 = vld [vmem:[#allocation2 + $0x48] sm:$0xff]
    %v365 = vld [vmem:[#allocation2 + $0x60] sm:$0xff]
    %v366 = vld [vmem:[#allocation2 + $0x68] sm:$0xff]
    %v367 = vld [vmem:[#allocation2 + $0x80] sm:$0xff]
    %v368 = vld [vmem:[#allocation2 + $0x88] sm:$0xff]
    %v369 = vld [vmem:[#allocation2 + $0xa0] sm:$0xff]
    %v370 = vld [vmem:[#allocation2 + $0xa8] sm:$0xff]
    %v371 = vld [vmem:[#allocation2 + $0xc0] sm:$0xff]
    %v372 = vld [vmem:[#allocation2 + $0xc8] sm:$0xff]
    %v373 = vld [vmem:[#allocation2 + $0xe0] sm:$0xff]
    %v374 = vld [vmem:[#allocation2 + $0xe8] sm:$0xff]
    %v375 = vld [vmem:[#allocation2 + $0x100] sm:$0xff]
    %v376 = vld [vmem:[#allocation2 + $0x108] sm:$0xff]
    %v377 = vld [vmem:[#allocation2 + $0x120] sm:$0xff]
    %v378 = vld [vmem:[#allocation2 + $0x128] sm:$0xff]
    %v379 = vld [vmem:[#allocation2 + $0x140] sm:$0xff]
    %v380 = vld [vmem:[#allocation2 + $0x148] sm:$0xff]
    %v381 = vld [vmem:[#allocation2 + $0x160] sm:$0xff]
    %v382 = vld [vmem:[#allocation2 + $0x168] sm:$0xff]
    %v383 = vld [vmem:[#allocation2 + $0x180] sm:$0xff]
    %v384 = vld [vmem:[#allocation2 + $0x188] sm:$0xff]
    %v385 = vld [vmem:[#allocation2 + $0x1a0] sm:$0xff]
    %v386 = vld [vmem:[#allocation2 + $0x1a8] sm:$0xff]
    %v387 = vld [vmem:[#allocation2 + $0x1c0] sm:$0xff]
    %v388 = vld [vmem:[#allocation2 + $0x1c8] sm:$0xff]
    %v389 = vld [vmem:[#allocation2 + $0x1e0] sm:$0xff]
    %v390 = vld [vmem:[#allocation2 + $0x1e8] sm:$0xff]
    %v391 = vld [vmem:[#allocation2 + $0x200] sm:$0xff]
    %v392 = vld [vmem:[#allocation2 + $0x208] sm:$0xff]
    %v393 = vld [vmem:[#allocation2 + $0x220] sm:$0xff]
    %v394 = vld [vmem:[#allocation2 + $0x228] sm:$0xff]
    %v395 = vld [vmem:[#allocation2 + $0x240] sm:$0xff]
    %v396 = vld [vmem:[#allocation2 + $0x248] sm:$0xff]
    %v397 = vld [vmem:[#allocation2 + $0x260] sm:$0xff]
    %v398 = vld [vmem:[#allocation2 + $0x268] sm:$0xff]
    %v399 = vld [vmem:[#allocation2 + $0x280] sm:$0xff]
    %v400 = vld [vmem:[#allocation2 + $0x288] sm:$0xff]
    %v401 = vld [vmem:[#allocation2 + $0x2a0] sm:$0xff]
    %v402 = vld [vmem:[#allocation2 + $0x2a8] sm:$0xff]
    %v403 = vld [vmem:[#allocation2 + $0x2c0] sm:$0xff]
    %v404 = vld [vmem:[#allocation2 + $0x2c8] sm:$0xff]
    %v405 = vld [vmem:[#allocation2 + $0x2e0] sm:$0xff]
    %v406 = vld [vmem:[#allocation2 + $0x2e8] sm:$0xff]
    %v407 = vld [vmem:[#allocation9] ss:$8 sm:$0x3]
    %v408 = vpack.c.bf16 %v352, %v352
    %v409 = vpack.c.bf16 %v353, %v353
    %v410 = vpack.c.bf16 %v354, %v354
    %v412 = vlaneseq
    %v413 = vshrl.u32 %v412, 7
    %v414 = vsub.s32 0, %v413
    %v415 = vrot.slane %v407, %v414
    %v416 = vlaneseq
    %v417 = vshrl.u32 %v416, 7
    %v418 = vsub.s32 1, %v417
    %v419 = vrot.slane %v407, %v418
    %422 = vmatprep.subr.bf16.mxu0 %v360
    %423 = vmatpush1.bf16.msra.mxu0 %v359
    %424 = vmatprep.subr.bf16.mxu0 %v362
    %425 = vmatpush1.bf16.msra.mxu0 %v361
    %426 = vmatprep.subr.bf16.mxu0 %v364
    %427 = vmatpush1.bf16.msra.mxu0 %v363
    %428 = vmatprep.subr.bf16.mxu0 %v366
    %429 = vmatpush1.bf16.msra.mxu0 %v365
    %430 = vmatprep.subr.bf16.mxu0 %v368
    %431 = vmatpush1.bf16.msra.mxu0 %v367
    %432 = vmatprep.subr.bf16.mxu0 %v370
    %433 = vmatpush1.bf16.msra.mxu0 %v369
    %434 = vmatprep.subr.bf16.mxu0 %v372
    %435 = vmatpush1.bf16.msra.mxu0 %v371
    %436 = vmatprep.subr.bf16.mxu0 %v374
    %437 = vmatpush1.bf16.msra.mxu0 %v373
    %438 = vmatprep.subr.bf16.mxu0 %v376
    %439 = vmatpush1.bf16.msra.mxu0 %v375
    %440 = vmatprep.subr.bf16.mxu0 %v378
    %441 = vmatpush1.bf16.msra.mxu0 %v377
    %442 = vmatprep.subr.bf16.mxu0 %v380
    %443 = vmatpush1.bf16.msra.mxu0 %v379
    %444 = vmatprep.subr.bf16.mxu0 %v382
    %445 = vmatpush1.bf16.msra.mxu0 %v381
    %446 = vmatprep.subr.bf16.mxu0 %v384
    %447 = vmatpush1.bf16.msra.mxu0 %v383
    %448 = vmatprep.subr.bf16.mxu0 %v386
    %449 = vmatpush1.bf16.msra.mxu0 %v385
    %450 = vmatprep.subr.bf16.mxu0 %v388
    %451 = vmatpush1.bf16.msra.mxu0 %v387
    %452 = vmatprep.subr.bf16.mxu0 %v390
    %453 = vmatpush1.bf16.msra.mxu0 %v389
    %454 = vmatprep.mubr.bf16.mxu0 %v409
    %455 = vmatmul.mubr.bf16.gmra.mrb[0].mxu0 %v408
    %v456 = vpop.f32.mrb[0].mxu0
    %v457 = vadd.f32 %v415, %v456
    %v458 = vpop.f32.mrb[0].mxu0
    %v459 = vadd.f32 %v419, %v458
    %v460 = vpop.f32.mrb[0].mxu0
    %v461 = vpop.f32.mrb[0].mxu0
    %462 = vdwg.mxu0
    %463 = vmatprep.subr.bf16.mxu0 %v392
    %464 = vmatpush1.bf16.msra.mxu0 %v391
    %465 = vmatprep.subr.bf16.mxu0 %v394
    %466 = vmatpush1.bf16.msra.mxu0 %v393
    %467 = vmatprep.subr.bf16.mxu0 %v396
    %468 = vmatpush1.bf16.msra.mxu0 %v395
    %469 = vmatprep.subr.bf16.mxu0 %v398
    %470 = vmatpush1.bf16.msra.mxu0 %v397
    %471 = vmatprep.subr.bf16.mxu0 %v400
    %472 = vmatpush1.bf16.msra.mxu0 %v399
    %473 = vmatprep.subr.bf16.mxu0 %v402
    %474 = vmatpush1.bf16.msra.mxu0 %v401
    %475 = vmatprep.subr.bf16.mxu0 %v404
    %476 = vmatpush1.bf16.msra.mxu0 %v403
    %477 = vmatprep.subr.bf16.mxu0 %v406
    %478 = vmatpush1.bf16.msra.mxu0 %v405
    %479 = vmatprep.subr.bf16.mxu0 0
    %480 = vmatpush1.bf16.msra.mxu0 0
    %481 = vmatprep.subr.bf16.mxu0 0
    %482 = vmatpush1.bf16.msra.mxu0 0
    %483 = vmatprep.subr.bf16.mxu0 0
    %484 = vmatpush1.bf16.msra.mxu0 0
    %485 = vmatprep.subr.bf16.mxu0 0
    %486 = vmatpush1.bf16.msra.mxu0 0
    %487 = vmatprep.subr.bf16.mxu0 0
    %488 = vmatpush1.bf16.msra.mxu0 0
    %489 = vmatprep.subr.bf16.mxu0 0
    %490 = vmatpush1.bf16.msra.mxu0 0
    %491 = vmatprep.subr.bf16.mxu0 0
    %492 = vmatpush1.bf16.msra.mxu0 0
    %493 = vmatprep.subr.bf16.mxu0 0
    %494 = vmatpush1.bf16.msra.mxu0 0
    %495 = vmatprep.mubr.bf16.mxu0 0
    %496 = vmatmul.mubr.bf16.gmra.mrb[0].mxu0 %v410
    %v497 = vpop.f32.mrb[0].mxu0
    %v498 = vadd.f32 %v457, %v497
    %v499 = vpop.f32.mrb[0].mxu0
    %v500 = vadd.f32 %v459, %v499
    %v501 = vpop.f32.mrb[0].mxu0
    %v502 = vpop.f32.mrb[0].mxu0
    %503 = vdwg.mxu0
    %v504 = vpack.c.bf16 %v498, %v498
    %v505 = vpack.c.bf16 %v500, %v500
    %v506 = vmul.bf16 %v504, 1045249613
    %v507 = vmul.bf16 %v505, 1045249613
    %v508 = vmax.bf16 %v504, %v506
    %v509 = vmax.bf16 %v505, %v507
    %s510 = smul.u32 4, 32
    %s511 = smul.u32 %s510, 4
    %s512 = sshll.u32 %s511, 4
    %513 = dma.done %s95, %s512
    %v514 = vld [vmem:[#allocation2 + $0x300] sm:$0xff]
    %v515 = vld [vmem:[#allocation2 + $0x308] sm:$0xff]
    %v516 = vld [vmem:[#allocation2 + $0x310] sm:$0xff]
    %v517 = vld [vmem:[#allocation2 + $0x318] sm:$0xff]
    %v518 = vld [vmem:[#allocation2 + $0x320] sm:$0xff]
    %v519 = vld [vmem:[#allocation2 + $0x328] sm:$0xff]
    %v520 = vld [vmem:[#allocation2 + $0x330] sm:$0xff]
    %v521 = vld [vmem:[#allocation2 + $0x338] sm:$0xff]
    %v522 = vld [vmem:[#allocation2 + $0x340] sm:$0xff]
    %v523 = vld [vmem:[#allocation2 + $0x348] sm:$0xff]
    %v524 = vld [vmem:[#allocation2 + $0x350] sm:$0xff]
    %v525 = vld [vmem:[#allocation2 + $0x358] sm:$0xff]
    %v526 = vld [vmem:[#allocation2 + $0x360] sm:$0xff]
    %v527 = vld [vmem:[#allocation2 + $0x368] sm:$0xff]
    %v528 = vld [vmem:[#allocation2 + $0x370] sm:$0xff]
    %v529 = vld [vmem:[#allocation2 + $0x378] sm:$0xff]
    %v530 = vld [vmem:[#allocation2 + $0x380] sm:$0xff]
    %v531 = vld [vmem:[#allocation2 + $0x388] sm:$0xff]
    %v532 = vld [vmem:[#allocation2 + $0x390] sm:$0xff]
    %v533 = vld [vmem:[#allocation2 + $0x398] sm:$0xff]
    %v534 = vld [vmem:[#allocation2 + $0x3a0] sm:$0xff]
    %v535 = vld [vmem:[#allocation2 + $0x3a8] sm:$0xff]
    %v536 = vld [vmem:[#allocation2 + $0x3b0] sm:$0xff]
    %v537 = vld [vmem:[#allocation2 + $0x3b8] sm:$0xff]
    %v538 = vld [vmem:[#allocation2 + $0x3c0] sm:$0xff]
    %v539 = vld [vmem:[#allocation2 + $0x3c8] sm:$0xff]
    %v540 = vld [vmem:[#allocation2 + $0x3d0] sm:$0xff]
    %v541 = vld [vmem:[#allocation2 + $0x3d8] sm:$0xff]
    %v542 = vld [vmem:[#allocation2 + $0x3e0] sm:$0xff]
    %v543 = vld [vmem:[#allocation2 + $0x3e8] sm:$0xff]
    %v544 = vld [vmem:[#allocation2 + $0x3f0] sm:$0xff]
    %v545 = vld [vmem:[#allocation2 + $0x3f8] sm:$0xff]
    %v546 = vld [vmem:[#allocation2 + $0x400] sm:$0xff]
    %v547 = vld [vmem:[#allocation2 + $0x408] sm:$0xff]
    %v548 = vld [vmem:[#allocation2 + $0x410] sm:$0xff]
    %v549 = vld [vmem:[#allocation2 + $0x418] sm:$0xff]
    %v550 = vld [vmem:[#allocation2 + $0x420] sm:$0xff]
    %v551 = vld [vmem:[#allocation2 + $0x428] sm:$0xff]
    %v552 = vld [vmem:[#allocation2 + $0x430] sm:$0xff]
    %v553 = vld [vmem:[#allocation2 + $0x438] sm:$0xff]
    %v554 = vld [vmem:[#allocation2 + $0x440] sm:$0xff]
    %v555 = vld [vmem:[#allocation2 + $0x448] sm:$0xff]
    %v556 = vld [vmem:[#allocation2 + $0x450] sm:$0xff]
    %v557 = vld [vmem:[#allocation2 + $0x458] sm:$0xff]
    %v558 = vld [vmem:[#allocation2 + $0x460] sm:$0xff]
    %v559 = vld [vmem:[#allocation2 + $0x468] sm:$0xff]
    %v560 = vld [vmem:[#allocation2 + $0x470] sm:$0xff]
    %v561 = vld [vmem:[#allocation2 + $0x478] sm:$0xff]
    %v562 = vld [vmem:[#allocation2 + $0x480] sm:$0xff]
    %v563 = vld [vmem:[#allocation2 + $0x488] sm:$0xff]
    %v564 = vld [vmem:[#allocation2 + $0x490] sm:$0xff]
    %v565 = vld [vmem:[#allocation2 + $0x498] sm:$0xff]
    %v566 = vld [vmem:[#allocation2 + $0x4a0] sm:$0xff]
    %v567 = vld [vmem:[#allocation2 + $0x4a8] sm:$0xff]
    %v568 = vld [vmem:[#allocation2 + $0x4b0] sm:$0xff]
    %v569 = vld [vmem:[#allocation2 + $0x4b8] sm:$0xff]
    %v570 = vld [vmem:[#allocation2 + $0x4c0] sm:$0xff]
    %v571 = vld [vmem:[#allocation2 + $0x4c8] sm:$0xff]
    %v572 = vld [vmem:[#allocation2 + $0x4d0] sm:$0xff]
    %v573 = vld [vmem:[#allocation2 + $0x4d8] sm:$0xff]
    %v574 = vld [vmem:[#allocation2 + $0x4e0] sm:$0xff]
    %v575 = vld [vmem:[#allocation2 + $0x4e8] sm:$0xff]
    %v576 = vld [vmem:[#allocation2 + $0x4f0] sm:$0xff]
    %v577 = vld [vmem:[#allocation2 + $0x4f8] sm:$0xff]
    %s578 = scalar_lea.vmem [#allocation9], 1
    %v579 = vld [vmem:[%s578] ss:$8 sm:$0xf]
    %v581 = vlaneseq
    %v582 = vshrl.u32 %v581, 7
    %v583 = vsub.s32 0, %v582
    %v584 = vrot.slane %v579, %v583
    %v585 = vlaneseq
    %v586 = vshrl.u32 %v585, 7
    %v587 = vsub.s32 1, %v586
    %v588 = vrot.slane %v579, %v587
    %v589 = vlaneseq
    %v590 = vshrl.u32 %v589, 7
    %v591 = vsub.s32 2, %v590
    %v592 = vrot.slane %v579, %v591
    %v593 = vlaneseq
    %v594 = vshrl.u32 %v593, 7
    %v595 = vsub.s32 3, %v594
    %v596 = vrot.slane %v579, %v595
    %601 = vmatprep.subr.bf16.mxu0 %v515
    %602 = vmatpush1.bf16.msra.mxu0 %v514
    %603 = vmatprep.subr.bf16.mxu0 %v519
    %604 = vmatpush1.bf16.msra.mxu0 %v518
    %605 = vmatprep.subr.bf16.mxu0 %v523
    %606 = vmatpush1.bf16.msra.mxu0 %v522
    %607 = vmatprep.subr.bf16.mxu0 %v527
    %608 = vmatpush1.bf16.msra.mxu0 %v526
    %609 = vmatprep.subr.bf16.mxu0 %v531
    %610 = vmatpush1.bf16.msra.mxu0 %v530
    %611 = vmatprep.subr.bf16.mxu0 %v535
    %612 = vmatpush1.bf16.msra.mxu0 %v534
    %613 = vmatprep.subr.bf16.mxu0 %v539
    %614 = vmatpush1.bf16.msra.mxu0 %v538
    %615 = vmatprep.subr.bf16.mxu0 %v543
    %616 = vmatpush1.bf16.msra.mxu0 %v542
    %617 = vmatprep.subr.bf16.mxu0 %v547
    %618 = vmatpush1.bf16.msra.mxu0 %v546
    %619 = vmatprep.subr.bf16.mxu0 %v551
    %620 = vmatpush1.bf16.msra.mxu0 %v550
    %621 = vmatprep.subr.bf16.mxu0 %v555
    %622 = vmatpush1.bf16.msra.mxu0 %v554
    %623 = vmatprep.subr.bf16.mxu0 %v559
    %624 = vmatpush1.bf16.msra.mxu0 %v558
    %625 = vmatprep.subr.bf16.mxu0 %v563
    %626 = vmatpush1.bf16.msra.mxu0 %v562
    %627 = vmatprep.subr.bf16.mxu0 %v567
    %628 = vmatpush1.bf16.msra.mxu0 %v566
    %629 = vmatprep.subr.bf16.mxu0 %v571
    %630 = vmatpush1.bf16.msra.mxu0 %v570
    %631 = vmatprep.subr.bf16.mxu0 %v575
    %632 = vmatpush1.bf16.msra.mxu0 %v574
    %633 = vmatprep.mubr.bf16.mxu0 %v509
    %634 = vmatmul.mubr.bf16.gmra.mrb[0].mxu0 %v508
    %v635 = vpop.f32.mrb[0].mxu0
    %v636 = vadd.f32 %v584, %v635
    %v637 = vpop.f32.mrb[0].mxu0
    %v638 = vadd.f32 %v588, %v637
    %v639 = vpop.f32.mrb[0].mxu0
    %v640 = vpop.f32.mrb[0].mxu0
    %641 = vdwg.mxu0
    %642 = vmatprep.subr.bf16.mxu0 %v517
    %643 = vmatpush1.bf16.msra.mxu0 %v516
    %644 = vmatprep.subr.bf16.mxu0 %v521
    %645 = vmatpush1.bf16.msra.mxu0 %v520
    %646 = vmatprep.subr.bf16.mxu0 %v525
    %647 = vmatpush1.bf16.msra.mxu0 %v524
    %648 = vmatprep.subr.bf16.mxu0 %v529
    %649 = vmatpush1.bf16.msra.mxu0 %v528
    %650 = vmatprep.subr.bf16.mxu0 %v533
    %651 = vmatpush1.bf16.msra.mxu0 %v532
    %652 = vmatprep.subr.bf16.mxu0 %v537
    %653 = vmatpush1.bf16.msra.mxu0 %v536
    %654 = vmatprep.subr.bf16.mxu0 %v541
    %655 = vmatpush1.bf16.msra.mxu0 %v540
    %656 = vmatprep.subr.bf16.mxu0 %v545
    %657 = vmatpush1.bf16.msra.mxu0 %v544
    %658 = vmatprep.subr.bf16.mxu0 %v549
    %659 = vmatpush1.bf16.msra.mxu0 %v548
    %660 = vmatprep.subr.bf16.mxu0 %v553
    %661 = vmatpush1.bf16.msra.mxu0 %v552
    %662 = vmatprep.subr.bf16.mxu0 %v557
    %663 = vmatpush1.bf16.msra.mxu0 %v556
    %664 = vmatprep.subr.bf16.mxu0 %v561
    %665 = vmatpush1.bf16.msra.mxu0 %v560
    %666 = vmatprep.subr.bf16.mxu0 %v565
    %667 = vmatpush1.bf16.msra.mxu0 %v564
    %668 = vmatprep.subr.bf16.mxu0 %v569
    %669 = vmatpush1.bf16.msra.mxu0 %v568
    %670 = vmatprep.subr.bf16.mxu0 %v573
    %671 = vmatpush1.bf16.msra.mxu0 %v572
    %672 = vmatprep.subr.bf16.mxu0 %v577
    %673 = vmatpush1.bf16.msra.mxu0 %v576
    %674 = vmatprep.mubr.bf16.mxu0 %v509
    %675 = vmatmul.mubr.bf16.gmra.mrb[0].mxu0 %v508
    %v676 = vpop.f32.mrb[0].mxu0
    %v677 = vadd.f32 %v592, %v676
    %v678 = vpop.f32.mrb[0].mxu0
    %v679 = vadd.f32 %v596, %v678
    %v680 = vpop.f32.mrb[0].mxu0
    %v681 = vpop.f32.mrb[0].mxu0
    %682 = vdwg.mxu0
    %v683 = vpack.c.bf16 %v636, %v636
    %v684 = vpack.c.bf16 %v638, %v638
    %v685 = vpack.c.bf16 %v677, %v677
    %v686 = vpack.c.bf16 %v679, %v679
    %v687 = vmul.bf16 %v683, 1045249613
    %v688 = vmul.bf16 %v684, 1045249613
    %v689 = vmul.bf16 %v685, 1045249613
    %v690 = vmul.bf16 %v686, 1045249613
    %v691 = vmax.bf16 %v683, %v687
    %v692 = vmax.bf16 %v684, %v688
    %v693 = vmax.bf16 %v685, %v689
    %v694 = vmax.bf16 %v686, %v690
    %s695 = smul.u32 4, 64
    %s696 = smul.u32 %s695, 4
    %s697 = sshll.u32 %s696, 4
    %698 = dma.done %s132, %s697
    %v699 = vld [vmem:[#allocation2 + $0x500] sm:$0xff]
    %v700 = vld [vmem:[#allocation2 + $0x508] sm:$0xff]
    %v701 = vld [vmem:[#allocation2 + $0x510] sm:$0xff]
    %v702 = vld [vmem:[#allocation2 + $0x518] sm:$0xff]
    %v703 = vld [vmem:[#allocation2 + $0x520] sm:$0xff]
    %v704 = vld [vmem:[#allocation2 + $0x528] sm:$0xff]
    %v705 = vld [vmem:[#allocation2 + $0x530] sm:$0xff]
    %v706 = vld [vmem:[#allocation2 + $0x538] sm:$0xff]
    %v707 = vld [vmem:[#allocation2 + $0x540] sm:$0xff]
    %v708 = vld [vmem:[#allocation2 + $0x548] sm:$0xff]
    %v709 = vld [vmem:[#allocation2 + $0x550] sm:$0xff]
    %v710 = vld [vmem:[#allocation2 + $0x558] sm:$0xff]
    %v711 = vld [vmem:[#allocation2 + $0x560] sm:$0xff]
    %v712 = vld [vmem:[#allocation2 + $0x568] sm:$0xff]
    %v713 = vld [vmem:[#allocation2 + $0x570] sm:$0xff]
    %v714 = vld [vmem:[#allocation2 + $0x578] sm:$0xff]
    %v715 = vld [vmem:[#allocation2 + $0x580] sm:$0xff]
    %v716 = vld [vmem:[#allocation2 + $0x588] sm:$0xff]
    %v717 = vld [vmem:[#allocation2 + $0x590] sm:$0xff]
    %v718 = vld [vmem:[#allocation2 + $0x598] sm:$0xff]
    %v719 = vld [vmem:[#allocation2 + $0x5a0] sm:$0xff]
    %v720 = vld [vmem:[#allocation2 + $0x5a8] sm:$0xff]
    %v721 = vld [vmem:[#allocation2 + $0x5b0] sm:$0xff]
    %v722 = vld [vmem:[#allocation2 + $0x5b8] sm:$0xff]
    %v723 = vld [vmem:[#allocation2 + $0x5c0] sm:$0xff]
    %v724 = vld [vmem:[#allocation2 + $0x5c8] sm:$0xff]
    %v725 = vld [vmem:[#allocation2 + $0x5d0] sm:$0xff]
    %v726 = vld [vmem:[#allocation2 + $0x5d8] sm:$0xff]
    %v727 = vld [vmem:[#allocation2 + $0x5e0] sm:$0xff]
    %v728 = vld [vmem:[#allocation2 + $0x5e8] sm:$0xff]
    %v729 = vld [vmem:[#allocation2 + $0x5f0] sm:$0xff]
    %v730 = vld [vmem:[#allocation2 + $0x5f8] sm:$0xff]
    %v731 = vld [vmem:[#allocation2 + $0x600] sm:$0xff]
    %v732 = vld [vmem:[#allocation2 + $0x608] sm:$0xff]
    %v733 = vld [vmem:[#allocation2 + $0x610] sm:$0xff]
    %v734 = vld [vmem:[#allocation2 + $0x618] sm:$0xff]
    %v735 = vld [vmem:[#allocation2 + $0x620] sm:$0xff]
    %v736 = vld [vmem:[#allocation2 + $0x628] sm:$0xff]
    %v737 = vld [vmem:[#allocation2 + $0x630] sm:$0xff]
    %v738 = vld [vmem:[#allocation2 + $0x638] sm:$0xff]
    %v739 = vld [vmem:[#allocation2 + $0x640] sm:$0xff]
    %v740 = vld [vmem:[#allocation2 + $0x648] sm:$0xff]
    %v741 = vld [vmem:[#allocation2 + $0x650] sm:$0xff]
    %v742 = vld [vmem:[#allocation2 + $0x658] sm:$0xff]
    %v743 = vld [vmem:[#allocation2 + $0x660] sm:$0xff]
    %v744 = vld [vmem:[#allocation2 + $0x668] sm:$0xff]
    %v745 = vld [vmem:[#allocation2 + $0x670] sm:$0xff]
    %v746 = vld [vmem:[#allocation2 + $0x678] sm:$0xff]
    %v747 = vld [vmem:[#allocation2 + $0x680] sm:$0xff]
    %v748 = vld [vmem:[#allocation2 + $0x688] sm:$0xff]
    %v749 = vld [vmem:[#allocation2 + $0x690] sm:$0xff]
    %v750 = vld [vmem:[#allocation2 + $0x698] sm:$0xff]
    %v751 = vld [vmem:[#allocation2 + $0x6a0] sm:$0xff]
    %v752 = vld [vmem:[#allocation2 + $0x6a8] sm:$0xff]
    %v753 = vld [vmem:[#allocation2 + $0x6b0] sm:$0xff]
    %v754 = vld [vmem:[#allocation2 + $0x6b8] sm:$0xff]
    %v755 = vld [vmem:[#allocation2 + $0x6c0] sm:$0xff]
    %v756 = vld [vmem:[#allocation2 + $0x6c8] sm:$0xff]
    %v757 = vld [vmem:[#allocation2 + $0x6d0] sm:$0xff]
    %v758 = vld [vmem:[#allocation2 + $0x6d8] sm:$0xff]
    %v759 = vld [vmem:[#allocation2 + $0x6e0] sm:$0xff]
    %v760 = vld [vmem:[#allocation2 + $0x6e8] sm:$0xff]
    %v761 = vld [vmem:[#allocation2 + $0x6f0] sm:$0xff]
    %v762 = vld [vmem:[#allocation2 + $0x6f8] sm:$0xff]
    %v763 = vld [vmem:[#allocation2 + $0x700] sm:$0xff]
    %v764 = vld [vmem:[#allocation2 + $0x708] sm:$0xff]
    %v765 = vld [vmem:[#allocation2 + $0x710] sm:$0xff]
    %v766 = vld [vmem:[#allocation2 + $0x718] sm:$0xff]
    %v767 = vld [vmem:[#allocation2 + $0x720] sm:$0xff]
    %v768 = vld [vmem:[#allocation2 + $0x728] sm:$0xff]
    %v769 = vld [vmem:[#allocation2 + $0x730] sm:$0xff]
    %v770 = vld [vmem:[#allocation2 + $0x738] sm:$0xff]
    %v771 = vld [vmem:[#allocation2 + $0x740] sm:$0xff]
    %v772 = vld [vmem:[#allocation2 + $0x748] sm:$0xff]
    %v773 = vld [vmem:[#allocation2 + $0x750] sm:$0xff]
    %v774 = vld [vmem:[#allocation2 + $0x758] sm:$0xff]
    %v775 = vld [vmem:[#allocation2 + $0x760] sm:$0xff]
    %v776 = vld [vmem:[#allocation2 + $0x768] sm:$0xff]
    %v777 = vld [vmem:[#allocation2 + $0x770] sm:$0xff]
    %v778 = vld [vmem:[#allocation2 + $0x778] sm:$0xff]
    %v779 = vld [vmem:[#allocation2 + $0x780] sm:$0xff]
    %v780 = vld [vmem:[#allocation2 + $0x788] sm:$0xff]
    %v781 = vld [vmem:[#allocation2 + $0x790] sm:$0xff]
    %v782 = vld [vmem:[#allocation2 + $0x798] sm:$0xff]
    %v783 = vld [vmem:[#allocation2 + $0x7a0] sm:$0xff]
    %v784 = vld [vmem:[#allocation2 + $0x7a8] sm:$0xff]
    %v785 = vld [vmem:[#allocation2 + $0x7b0] sm:$0xff]
    %v786 = vld [vmem:[#allocation2 + $0x7b8] sm:$0xff]
    %v787 = vld [vmem:[#allocation2 + $0x7c0] sm:$0xff]
    %v788 = vld [vmem:[#allocation2 + $0x7c8] sm:$0xff]
    %v789 = vld [vmem:[#allocation2 + $0x7d0] sm:$0xff]
    %v790 = vld [vmem:[#allocation2 + $0x7d8] sm:$0xff]
    %v791 = vld [vmem:[#allocation2 + $0x7e0] sm:$0xff]
    %v792 = vld [vmem:[#allocation2 + $0x7e8] sm:$0xff]
    %v793 = vld [vmem:[#allocation2 + $0x7f0] sm:$0xff]
    %v794 = vld [vmem:[#allocation2 + $0x7f8] sm:$0xff]
    %v795 = vld [vmem:[#allocation2 + $0x800] sm:$0xff]
    %v796 = vld [vmem:[#allocation2 + $0x808] sm:$0xff]
    %v797 = vld [vmem:[#allocation2 + $0x810] sm:$0xff]
    %v798 = vld [vmem:[#allocation2 + $0x818] sm:$0xff]
    %v799 = vld [vmem:[#allocation2 + $0x820] sm:$0xff]
    %v800 = vld [vmem:[#allocation2 + $0x828] sm:$0xff]
    %v801 = vld [vmem:[#allocation2 + $0x830] sm:$0xff]
    %v802 = vld [vmem:[#allocation2 + $0x838] sm:$0xff]
    %v803 = vld [vmem:[#allocation2 + $0x840] sm:$0xff]
    %v804 = vld [vmem:[#allocation2 + $0x848] sm:$0xff]
    %v805 = vld [vmem:[#allocation2 + $0x850] sm:$0xff]
    %v806 = vld [vmem:[#allocation2 + $0x858] sm:$0xff]
    %v807 = vld [vmem:[#allocation2 + $0x860] sm:$0xff]
    %v808 = vld [vmem:[#allocation2 + $0x868] sm:$0xff]
    %v809 = vld [vmem:[#allocation2 + $0x870] sm:$0xff]
    %v810 = vld [vmem:[#allocation2 + $0x878] sm:$0xff]
    %v811 = vld [vmem:[#allocation2 + $0x880] sm:$0xff]
    %v812 = vld [vmem:[#allocation2 + $0x888] sm:$0xff]
    %v813 = vld [vmem:[#allocation2 + $0x890] sm:$0xff]
    %v814 = vld [vmem:[#allocation2 + $0x898] sm:$0xff]
    %v815 = vld [vmem:[#allocation2 + $0x8a0] sm:$0xff]
    %v816 = vld [vmem:[#allocation2 + $0x8a8] sm:$0xff]
    %v817 = vld [vmem:[#allocation2 + $0x8b0] sm:$0xff]
    %v818 = vld [vmem:[#allocation2 + $0x8b8] sm:$0xff]
    %v819 = vld [vmem:[#allocation2 + $0x8c0] sm:$0xff]
    %v820 = vld [vmem:[#allocation2 + $0x8c8] sm:$0xff]
    %v821 = vld [vmem:[#allocation2 + $0x8d0] sm:$0xff]
    %v822 = vld [vmem:[#allocation2 + $0x8d8] sm:$0xff]
    %v823 = vld [vmem:[#allocation2 + $0x8e0] sm:$0xff]
    %v824 = vld [vmem:[#allocation2 + $0x8e8] sm:$0xff]
    %v825 = vld [vmem:[#allocation2 + $0x8f0] sm:$0xff]
    %v826 = vld [vmem:[#allocation2 + $0x8f8] sm:$0xff]
    %s827 = scalar_lea.vmem [#allocation9], 2
    %v828 = vld [vmem:[%s827] ss:$8 sm:$0xf]
    %v830 = vlaneseq
    %v831 = vshrl.u32 %v830, 7
    %v832 = vsub.s32 0, %v831
    %v833 = vrot.slane %v828, %v832
    %v834 = vlaneseq
    %v835 = vshrl.u32 %v834, 7
    %v836 = vsub.s32 1, %v835
    %v837 = vrot.slane %v828, %v836
    %v838 = vlaneseq
    %v839 = vshrl.u32 %v838, 7
    %v840 = vsub.s32 2, %v839
    %v841 = vrot.slane %v828, %v840
    %v842 = vlaneseq
    %v843 = vshrl.u32 %v842, 7
    %v844 = vsub.s32 3, %v843
    %v845 = vrot.slane %v828, %v844
    %850 = vmatprep.subr.bf16.mxu0 %v700
    %851 = vmatpush1.bf16.msra.mxu0 %v699
    %852 = vmatprep.subr.bf16.mxu0 %v704
    %853 = vmatpush1.bf16.msra.mxu0 %v703
    %854 = vmatprep.subr.bf16.mxu0 %v708
    %855 = vmatpush1.bf16.msra.mxu0 %v707
    %856 = vmatprep.subr.bf16.mxu0 %v712
    %857 = vmatpush1.bf16.msra.mxu0 %v711
    %858 = vmatprep.subr.bf16.mxu0 %v716
    %859 = vmatpush1.bf16.msra.mxu0 %v715
    %860 = vmatprep.subr.bf16.mxu0 %v720
    %861 = vmatpush1.bf16.msra.mxu0 %v719
    %862 = vmatprep.subr.bf16.mxu0 %v724
    %863 = vmatpush1.bf16.msra.mxu0 %v723
    %864 = vmatprep.subr.bf16.mxu0 %v728
    %865 = vmatpush1.bf16.msra.mxu0 %v727
    %866 = vmatprep.subr.bf16.mxu0 %v732
    %867 = vmatpush1.bf16.msra.mxu0 %v731
    %868 = vmatprep.subr.bf16.mxu0 %v736
    %869 = vmatpush1.bf16.msra.mxu0 %v735
    %870 = vmatprep.subr.bf16.mxu0 %v740
    %871 = vmatpush1.bf16.msra.mxu0 %v739
    %872 = vmatprep.subr.bf16.mxu0 %v744
    %873 = vmatpush1.bf16.msra.mxu0 %v743
    %874 = vmatprep.subr.bf16.mxu0 %v748
    %875 = vmatpush1.bf16.msra.mxu0 %v747
    %876 = vmatprep.subr.bf16.mxu0 %v752
    %877 = vmatpush1.bf16.msra.mxu0 %v751
    %878 = vmatprep.subr.bf16.mxu0 %v756
    %879 = vmatpush1.bf16.msra.mxu0 %v755
    %880 = vmatprep.subr.bf16.mxu0 %v760
    %881 = vmatpush1.bf16.msra.mxu0 %v759
    %882 = vmatprep.mubr.bf16.mxu0 %v692
    %883 = vmatmul.mubr.bf16.gmra.mrb[0].mxu0 %v691
    %v884 = vpop.f32.mrb[0].mxu0
    %v885 = vadd.f32 %v833, %v884
    %v886 = vpop.f32.mrb[0].mxu0
    %v887 = vadd.f32 %v837, %v886
    %v888 = vpop.f32.mrb[0].mxu0
    %v889 = vpop.f32.mrb[0].mxu0
    %890 = vdwg.mxu0
    %891 = vmatprep.subr.bf16.mxu0 %v764
    %892 = vmatpush1.bf16.msra.mxu0 %v763
    %893 = vmatprep.subr.bf16.mxu0 %v768
    %894 = vmatpush1.bf16.msra.mxu0 %v767
    %895 = vmatprep.subr.bf16.mxu0 %v772
    %896 = vmatpush1.bf16.msra.mxu0 %v771
    %897 = vmatprep.subr.bf16.mxu0 %v776
    %898 = vmatpush1.bf16.msra.mxu0 %v775
    %899 = vmatprep.subr.bf16.mxu0 %v780
    %900 = vmatpush1.bf16.msra.mxu0 %v779
    %901 = vmatprep.subr.bf16.mxu0 %v784
    %902 = vmatpush1.bf16.msra.mxu0 %v783
    %903 = vmatprep.subr.bf16.mxu0 %v788
    %904 = vmatpush1.bf16.msra.mxu0 %v787
    %905 = vmatprep.subr.bf16.mxu0 %v792
    %906 = vmatpush1.bf16.msra.mxu0 %v791
    %907 = vmatprep.subr.bf16.mxu0 %v796
    %908 = vmatpush1.bf16.msra.mxu0 %v795
    %909 = vmatprep.subr.bf16.mxu0 %v800
    %910 = vmatpush1.bf16.msra.mxu0 %v799
    %911 = vmatprep.subr.bf16.mxu0 %v804
    %912 = vmatpush1.bf16.msra.mxu0 %v803
    %913 = vmatprep.subr.bf16.mxu0 %v808
    %914 = vmatpush1.bf16.msra.mxu0 %v807
    %915 = vmatprep.subr.bf16.mxu0 %v812
    %916 = vmatpush1.bf16.msra.mxu0 %v811
    %917 = vmatprep.subr.bf16.mxu0 %v816
    %918 = vmatpush1.bf16.msra.mxu0 %v815
    %919 = vmatprep.subr.bf16.mxu0 %v820
    %920 = vmatpush1.bf16.msra.mxu0 %v819
    %921 = vmatprep.subr.bf16.mxu0 %v824
    %922 = vmatpush1.bf16.msra.mxu0 %v823
    %923 = vmatprep.mubr.bf16.mxu0 %v694
    %924 = vmatmul.mubr.bf16.gmra.mrb[0].mxu0 %v693
    %v925 = vpop.f32.mrb[0].mxu0
    %v926 = vadd.f32 %v885, %v925
    %v927 = vpop.f32.mrb[0].mxu0
    %v928 = vadd.f32 %v887, %v927
    %v929 = vpop.f32.mrb[0].mxu0
    %v930 = vpop.f32.mrb[0].mxu0
    %931 = vdwg.mxu0
    %932 = vmatprep.subr.bf16.mxu0 %v702
    %933 = vmatpush1.bf16.msra.mxu0 %v701
    %934 = vmatprep.subr.bf16.mxu0 %v706
    %935 = vmatpush1.bf16.msra.mxu0 %v705
    %936 = vmatprep.subr.bf16.mxu0 %v710
    %937 = vmatpush1.bf16.msra.mxu0 %v709
    %938 = vmatprep.subr.bf16.mxu0 %v714
    %939 = vmatpush1.bf16.msra.mxu0 %v713
    %940 = vmatprep.subr.bf16.mxu0 %v718
    %941 = vmatpush1.bf16.msra.mxu0 %v717
    %942 = vmatprep.subr.bf16.mxu0 %v722
    %943 = vmatpush1.bf16.msra.mxu0 %v721
    %944 = vmatprep.subr.bf16.mxu0 %v726
    %945 = vmatpush1.bf16.msra.mxu0 %v725
    %946 = vmatprep.subr.bf16.mxu0 %v730
    %947 = vmatpush1.bf16.msra.mxu0 %v729
    %948 = vmatprep.subr.bf16.mxu0 %v734
    %949 = vmatpush1.bf16.msra.mxu0 %v733
    %950 = vmatprep.subr.bf16.mxu0 %v738
    %951 = vmatpush1.bf16.msra.mxu0 %v737
    %952 = vmatprep.subr.bf16.mxu0 %v742
    %953 = vmatpush1.bf16.msra.mxu0 %v741
    %954 = vmatprep.subr.bf16.mxu0 %v746
    %955 = vmatpush1.bf16.msra.mxu0 %v745
    %956 = vmatprep.subr.bf16.mxu0 %v750
    %957 = vmatpush1.bf16.msra.mxu0 %v749
    %958 = vmatprep.subr.bf16.mxu0 %v754
    %959 = vmatpush1.bf16.msra.mxu0 %v753
    %960 = vmatprep.subr.bf16.mxu0 %v758
    %961 = vmatpush1.bf16.msra.mxu0 %v757
    %962 = vmatprep.subr.bf16.mxu0 %v762
    %963 = vmatpush1.bf16.msra.mxu0 %v761
    %964 = vmatprep.mubr.bf16.mxu0 %v692
    %965 = vmatmul.mubr.bf16.gmra.mrb[0].mxu0 %v691
    %v966 = vpop.f32.mrb[0].mxu0
    %v967 = vadd.f32 %v841, %v966
    %v968 = vpop.f32.mrb[0].mxu0
    %v969 = vadd.f32 %v845, %v968
    %v970 = vpop.f32.mrb[0].mxu0
    %v971 = vpop.f32.mrb[0].mxu0
    %972 = vdwg.mxu0
    %973 = vmatprep.subr.bf16.mxu0 %v766
    %974 = vmatpush1.bf16.msra.mxu0 %v765
    %975 = vmatprep.subr.bf16.mxu0 %v770
    %976 = vmatpush1.bf16.msra.mxu0 %v769
    %977 = vmatprep.subr.bf16.mxu0 %v774
    %978 = vmatpush1.bf16.msra.mxu0 %v773
    %979 = vmatprep.subr.bf16.mxu0 %v778
    %980 = vmatpush1.bf16.msra.mxu0 %v777
    %981 = vmatprep.subr.bf16.mxu0 %v782
    %982 = vmatpush1.bf16.msra.mxu0 %v781
    %983 = vmatprep.subr.bf16.mxu0 %v786
    %984 = vmatpush1.bf16.msra.mxu0 %v785
    %985 = vmatprep.subr.bf16.mxu0 %v790
    %986 = vmatpush1.bf16.msra.mxu0 %v789
    %987 = vmatprep.subr.bf16.mxu0 %v794
    %988 = vmatpush1.bf16.msra.mxu0 %v793
    %989 = vmatprep.subr.bf16.mxu0 %v798
    %990 = vmatpush1.bf16.msra.mxu0 %v797
    %991 = vmatprep.subr.bf16.mxu0 %v802
    %992 = vmatpush1.bf16.msra.mxu0 %v801
    %993 = vmatprep.subr.bf16.mxu0 %v806
    %994 = vmatpush1.bf16.msra.mxu0 %v805
    %995 = vmatprep.subr.bf16.mxu0 %v810
    %996 = vmatpush1.bf16.msra.mxu0 %v809
    %997 = vmatprep.subr.bf16.mxu0 %v814
    %998 = vmatpush1.bf16.msra.mxu0 %v813
    %999 = vmatprep.subr.bf16.mxu0 %v818
    %1000 = vmatpush1.bf16.msra.mxu0 %v817
    %1001 = vmatprep.subr.bf16.mxu0 %v822
    %1002 = vmatpush1.bf16.msra.mxu0 %v821
    %1003 = vmatprep.subr.bf16.mxu0 %v826
    %1004 = vmatpush1.bf16.msra.mxu0 %v825
    %1005 = vmatprep.mubr.bf16.mxu0 %v694
    %1006 = vmatmul.mubr.bf16.gmra.mrb[0].mxu0 %v693
    %v1007 = vpop.f32.mrb[0].mxu0
    %v1008 = vadd.f32 %v967, %v1007
    %v1009 = vpop.f32.mrb[0].mxu0
    %v1010 = vadd.f32 %v969, %v1009
    %v1011 = vpop.f32.mrb[0].mxu0
    %v1012 = vpop.f32.mrb[0].mxu0
    %1013 = vdwg.mxu0
    %v1014 = vpack.c.bf16 %v926, %v926
    %v1015 = vpack.c.bf16 %v928, %v928
    %v1016 = vpack.c.bf16 %v1008, %v1008
    %v1017 = vpack.c.bf16 %v1010, %v1010
    %v1018 = vmul.bf16 %v1014, 1045249613
    %v1019 = vmul.bf16 %v1015, 1045249613
    %v1020 = vmul.bf16 %v1016, 1045249613
    %v1021 = vmul.bf16 %v1017, 1045249613
    %v1022 = vmax.bf16 %v1014, %v1018
    %v1023 = vmax.bf16 %v1015, %v1019
    %v1024 = vmax.bf16 %v1016, %v1020
    %v1025 = vmax.bf16 %v1017, %v1021
    %s1026 = sshll.u32 %s696, 4
    %1027 = dma.done %s169, %s1026
    %v1028 = vld [vmem:[#allocation2 + $0x900] sm:$0xff]
    %v1029 = vld [vmem:[#allocation2 + $0x908] sm:$0xff]
    %v1030 = vld [vmem:[#allocation2 + $0x920] sm:$0xff]
    %v1031 = vld [vmem:[#allocation2 + $0x928] sm:$0xff]
    %v1032 = vld [vmem:[#allocation2 + $0x940] sm:$0xff]
    %v1033 = vld [vmem:[#allocation2 + $0x948] sm:$0xff]
    %v1034 = vld [vmem:[#allocation2 + $0x960] sm:$0xff]
    %v1035 = vld [vmem:[#allocation2 + $0x968] sm:$0xff]
    %v1036 = vld [vmem:[#allocation2 + $0x980] sm:$0xff]
    %v1037 = vld [vmem:[#allocation2 + $0x988] sm:$0xff]
    %v1038 = vld [vmem:[#allocation2 + $0x9a0] sm:$0xff]
    %v1039 = vld [vmem:[#allocation2 + $0x9a8] sm:$0xff]
    %v1040 = vld [vmem:[#allocation2 + $0x9c0] sm:$0xff]
    %v1041 = vld [vmem:[#allocation2 + $0x9c8] sm:$0xff]
    %v1042 = vld [vmem:[#allocation2 + $0x9e0] sm:$0xff]
    %v1043 = vld [vmem:[#allocation2 + $0x9e8] sm:$0xff]
    %v1044 = vld [vmem:[#allocation2 + $0xa00] sm:$0xff]
    %v1045 = vld [vmem:[#allocation2 + $0xa08] sm:$0xff]
    %v1046 = vld [vmem:[#allocation2 + $0xa20] sm:$0xff]
    %v1047 = vld [vmem:[#allocation2 + $0xa28] sm:$0xff]
    %v1048 = vld [vmem:[#allocation2 + $0xa40] sm:$0xff]
    %v1049 = vld [vmem:[#allocation2 + $0xa48] sm:$0xff]
    %v1050 = vld [vmem:[#allocation2 + $0xa60] sm:$0xff]
    %v1051 = vld [vmem:[#allocation2 + $0xa68] sm:$0xff]
    %v1052 = vld [vmem:[#allocation2 + $0xa80] sm:$0xff]
    %v1053 = vld [vmem:[#allocation2 + $0xa88] sm:$0xff]
    %v1054 = vld [vmem:[#allocation2 + $0xaa0] sm:$0xff]
    %v1055 = vld [vmem:[#allocation2 + $0xaa8] sm:$0xff]
    %v1056 = vld [vmem:[#allocation2 + $0xac0] sm:$0xff]
    %v1057 = vld [vmem:[#allocation2 + $0xac8] sm:$0xff]
    %v1058 = vld [vmem:[#allocation2 + $0xae0] sm:$0xff]
    %v1059 = vld [vmem:[#allocation2 + $0xae8] sm:$0xff]
    %v1060 = vld [vmem:[#allocation2 + $0xb00] sm:$0xff]
    %v1061 = vld [vmem:[#allocation2 + $0xb08] sm:$0xff]
    %v1062 = vld [vmem:[#allocation2 + $0xb20] sm:$0xff]
    %v1063 = vld [vmem:[#allocation2 + $0xb28] sm:$0xff]
    %v1064 = vld [vmem:[#allocation2 + $0xb40] sm:$0xff]
    %v1065 = vld [vmem:[#allocation2 + $0xb48] sm:$0xff]
    %v1066 = vld [vmem:[#allocation2 + $0xb60] sm:$0xff]
    %v1067 = vld [vmem:[#allocation2 + $0xb68] sm:$0xff]
    %v1068 = vld [vmem:[#allocation2 + $0xb80] sm:$0xff]
    %v1069 = vld [vmem:[#allocation2 + $0xb88] sm:$0xff]
    %v1070 = vld [vmem:[#allocation2 + $0xba0] sm:$0xff]
    %v1071 = vld [vmem:[#allocation2 + $0xba8] sm:$0xff]
    %v1072 = vld [vmem:[#allocation2 + $0xbc0] sm:$0xff]
    %v1073 = vld [vmem:[#allocation2 + $0xbc8] sm:$0xff]
    %v1074 = vld [vmem:[#allocation2 + $0xbe0] sm:$0xff]
    %v1075 = vld [vmem:[#allocation2 + $0xbe8] sm:$0xff]
    %v1076 = vld [vmem:[#allocation2 + $0xc00] sm:$0xff]
    %v1077 = vld [vmem:[#allocation2 + $0xc08] sm:$0xff]
    %v1078 = vld [vmem:[#allocation2 + $0xc20] sm:$0xff]
    %v1079 = vld [vmem:[#allocation2 + $0xc28] sm:$0xff]
    %v1080 = vld [vmem:[#allocation2 + $0xc40] sm:$0xff]
    %v1081 = vld [vmem:[#allocation2 + $0xc48] sm:$0xff]
    %v1082 = vld [vmem:[#allocation2 + $0xc60] sm:$0xff]
    %v1083 = vld [vmem:[#allocation2 + $0xc68] sm:$0xff]
    %v1084 = vld [vmem:[#allocation2 + $0xc80] sm:$0xff]
    %v1085 = vld [vmem:[#allocation2 + $0xc88] sm:$0xff]
    %v1086 = vld [vmem:[#allocation2 + $0xca0] sm:$0xff]
    %v1087 = vld [vmem:[#allocation2 + $0xca8] sm:$0xff]
    %v1088 = vld [vmem:[#allocation2 + $0xcc0] sm:$0xff]
    %v1089 = vld [vmem:[#allocation2 + $0xcc8] sm:$0xff]
    %v1090 = vld [vmem:[#allocation2 + $0xce0] sm:$0xff]
    %v1091 = vld [vmem:[#allocation2 + $0xce8] sm:$0xff]
    %s1092 = scalar_lea.vmem [#allocation9], 3
    %v1093 = vld [vmem:[%s1092] ss:$8 sm:$0x3]
    %v1095 = vlaneseq
    %v1096 = vshrl.u32 %v1095, 7
    %v1097 = vsub.s32 0, %v1096
    %v1098 = vrot.slane %v1093, %v1097
    %v1099 = vlaneseq
    %v1100 = vshrl.u32 %v1099, 7
    %v1101 = vsub.s32 1, %v1100
    %v1102 = vrot.slane %v1093, %v1101
    %1105 = vmatprep.subr.bf16.mxu0 %v1029
    %1106 = vmatpush1.bf16.msra.mxu0 %v1028
    %1107 = vmatprep.subr.bf16.mxu0 %v1031
    %1108 = vmatpush1.bf16.msra.mxu0 %v1030
    %1109 = vmatprep.subr.bf16.mxu0 %v1033
    %1110 = vmatpush1.bf16.msra.mxu0 %v1032
    %1111 = vmatprep.subr.bf16.mxu0 %v1035
    %1112 = vmatpush1.bf16.msra.mxu0 %v1034
    %1113 = vmatprep.subr.bf16.mxu0 %v1037
    %1114 = vmatpush1.bf16.msra.mxu0 %v1036
    %1115 = vmatprep.subr.bf16.mxu0 %v1039
    %1116 = vmatpush1.bf16.msra.mxu0 %v1038
    %1117 = vmatprep.subr.bf16.mxu0 %v1041
    %1118 = vmatpush1.bf16.msra.mxu0 %v1040
    %1119 = vmatprep.subr.bf16.mxu0 %v1043
    %1120 = vmatpush1.bf16.msra.mxu0 %v1042
    %1121 = vmatprep.subr.bf16.mxu0 %v1045
    %1122 = vmatpush1.bf16.msra.mxu0 %v1044
    %1123 = vmatprep.subr.bf16.mxu0 %v1047
    %1124 = vmatpush1.bf16.msra.mxu0 %v1046
    %1125 = vmatprep.subr.bf16.mxu0 %v1049
    %1126 = vmatpush1.bf16.msra.mxu0 %v1048
    %1127 = vmatprep.subr.bf16.mxu0 %v1051
    %1128 = vmatpush1.bf16.msra.mxu0 %v1050
    %1129 = vmatprep.subr.bf16.mxu0 %v1053
    %1130 = vmatpush1.bf16.msra.mxu0 %v1052
    %1131 = vmatprep.subr.bf16.mxu0 %v1055
    %1132 = vmatpush1.bf16.msra.mxu0 %v1054
    %1133 = vmatprep.subr.bf16.mxu0 %v1057
    %1134 = vmatpush1.bf16.msra.mxu0 %v1056
    %1135 = vmatprep.subr.bf16.mxu0 %v1059
    %1136 = vmatpush1.bf16.msra.mxu0 %v1058
    %1137 = vmatprep.mubr.bf16.mxu0 %v1023
    %1138 = vmatmul.mubr.bf16.gmra.mrb[0].mxu0 %v1022
    %v1139 = vpop.f32.mrb[0].mxu0
    %v1140 = vadd.f32 %v1098, %v1139
    %v1141 = vpop.f32.mrb[0].mxu0
    %v1142 = vadd.f32 %v1102, %v1141
    %v1143 = vpop.f32.mrb[0].mxu0
    %v1144 = vpop.f32.mrb[0].mxu0
    %1145 = vdwg.mxu0
    %1146 = vmatprep.subr.bf16.mxu0 %v1061
    %1147 = vmatpush1.bf16.msra.mxu0 %v1060
    %1148 = vmatprep.subr.bf16.mxu0 %v1063
    %1149 = vmatpush1.bf16.msra.mxu0 %v1062
    %1150 = vmatprep.subr.bf16.mxu0 %v1065
    %1151 = vmatpush1.bf16.msra.mxu0 %v1064
    %1152 = vmatprep.subr.bf16.mxu0 %v1067
    %1153 = vmatpush1.bf16.msra.mxu0 %v1066
    %1154 = vmatprep.subr.bf16.mxu0 %v1069
    %1155 = vmatpush1.bf16.msra.mxu0 %v1068
    %1156 = vmatprep.subr.bf16.mxu0 %v1071
    %1157 = vmatpush1.bf16.msra.mxu0 %v1070
    %1158 = vmatprep.subr.bf16.mxu0 %v1073
    %1159 = vmatpush1.bf16.msra.mxu0 %v1072
    %1160 = vmatprep.subr.bf16.mxu0 %v1075
    %1161 = vmatpush1.bf16.msra.mxu0 %v1074
    %1162 = vmatprep.subr.bf16.mxu0 %v1077
    %1163 = vmatpush1.bf16.msra.mxu0 %v1076
    %1164 = vmatprep.subr.bf16.mxu0 %v1079
    %1165 = vmatpush1.bf16.msra.mxu0 %v1078
    %1166 = vmatprep.subr.bf16.mxu0 %v1081
    %1167 = vmatpush1.bf16.msra.mxu0 %v1080
    %1168 = vmatprep.subr.bf16.mxu0 %v1083
    %1169 = vmatpush1.bf16.msra.mxu0 %v1082
    %1170 = vmatprep.subr.bf16.mxu0 %v1085
    %1171 = vmatpush1.bf16.msra.mxu0 %v1084
    %1172 = vmatprep.subr.bf16.mxu0 %v1087
    %1173 = vmatpush1.bf16.msra.mxu0 %v1086
    %1174 = vmatprep.subr.bf16.mxu0 %v1089
    %1175 = vmatpush1.bf16.msra.mxu0 %v1088
    %1176 = vmatprep.subr.bf16.mxu0 %v1091
    %1177 = vmatpush1.bf16.msra.mxu0 %v1090
    %1178 = vmatprep.mubr.bf16.mxu0 %v1025
    %1179 = vmatmul.mubr.bf16.gmra.mrb[0].mxu0 %v1024
    %v1180 = vpop.f32.mrb[0].mxu0
    %v1181 = vadd.f32 %v1140, %v1180
    %v1182 = vpop.f32.mrb[0].mxu0
    %v1183 = vadd.f32 %v1142, %v1182
    %v1184 = vpop.f32.mrb[0].mxu0
    %v1185 = vpop.f32.mrb[0].mxu0
    %1186 = vdwg.mxu0
    %v1187 = vpack.c.bf16 %v1181, %v1181
    %v1188 = vpack.c.bf16 %v1183, %v1183
    %v1189 = vmul.bf16 %v1187, 1045249613
    %v1190 = vmul.bf16 %v1188, 1045249613
    %v1191 = vmax.bf16 %v1187, %v1189
    %v1192 = vmax.bf16 %v1188, %v1190
    %s1193 = sshll.u32 %s511, 4
    %1194 = dma.done %s206, %s1193
    %v1195 = vld [vmem:[#allocation2 + $0xd00] sm:$0xff]
    %v1196 = vld [vmem:[#allocation2 + $0xd20] sm:$0xff]
    %v1197 = vld [vmem:[#allocation2 + $0xd40] sm:$0xff]
    %v1198 = vld [vmem:[#allocation2 + $0xd60] sm:$0xff]
    %v1199 = vld [vmem:[#allocation2 + $0xd80] sm:$0xff]
    %v1200 = vld [vmem:[#allocation2 + $0xda0] sm:$0xff]
    %v1201 = vld [vmem:[#allocation2 + $0xdc0] sm:$0xff]
    %v1202 = vld [vmem:[#allocation2 + $0xde0] sm:$0xff]
    %v1203 = vld [vmem:[#allocation2 + $0xe00] sm:$0xff]
    %v1204 = vld [vmem:[#allocation2 + $0xe20] sm:$0xff]
    %v1205 = vld [vmem:[#allocation2 + $0xe40] sm:$0xff]
    %v1206 = vld [vmem:[#allocation2 + $0xe60] sm:$0xff]
    %v1207 = vld [vmem:[#allocation2 + $0xe80] sm:$0xff]
    %v1208 = vld [vmem:[#allocation2 + $0xea0] sm:$0xff]
    %v1209 = vld [vmem:[#allocation2 + $0xec0] sm:$0xff]
    %v1210 = vld [vmem:[#allocation2 + $0xee0] sm:$0xff]
    %v1211 = vld [vmem:[#allocation9 + $0x4] ss:$0 sm:$0xff]
    %1212 = vmatprep.subr.bf16.mxu0 0
    %1213 = vmatpush1.bf16.msra.mxu0 %v1195
    %1214 = vmatprep.subr.bf16.mxu0 0
    %1215 = vmatpush1.bf16.msra.mxu0 %v1196
    %1216 = vmatprep.subr.bf16.mxu0 0
    %1217 = vmatpush1.bf16.msra.mxu0 %v1197
    %1218 = vmatprep.subr.bf16.mxu0 0
    %1219 = vmatpush1.bf16.msra.mxu0 %v1198
    %1220 = vmatprep.subr.bf16.mxu0 0
    %1221 = vmatpush1.bf16.msra.mxu0 %v1199
    %1222 = vmatprep.subr.bf16.mxu0 0
    %1223 = vmatpush1.bf16.msra.mxu0 %v1200
    %1224 = vmatprep.subr.bf16.mxu0 0
    %1225 = vmatpush1.bf16.msra.mxu0 %v1201
    %1226 = vmatprep.subr.bf16.mxu0 0
    %1227 = vmatpush1.bf16.msra.mxu0 %v1202
    %1228 = vmatprep.subr.bf16.mxu0 0
    %1229 = vmatpush1.bf16.msra.mxu0 %v1203
    %1230 = vmatprep.subr.bf16.mxu0 0
    %1231 = vmatpush1.bf16.msra.mxu0 %v1204
    %1232 = vmatprep.subr.bf16.mxu0 0
    %1233 = vmatpush1.bf16.msra.mxu0 %v1205
    %1234 = vmatprep.subr.bf16.mxu0 0
    %1235 = vmatpush1.bf16.msra.mxu0 %v1206
    %1236 = vmatprep.subr.bf16.mxu0 0
    %1237 = vmatpush1.bf16.msra.mxu0 %v1207
    %1238 = vmatprep.subr.bf16.mxu0 0
    %1239 = vmatpush1.bf16.msra.mxu0 %v1208
    %1240 = vmatprep.subr.bf16.mxu0 0
    %1241 = vmatpush1.bf16.msra.mxu0 %v1209
    %1242 = vmatprep.subr.bf16.mxu0 0
    %1243 = vmatpush1.bf16.msra.mxu0 %v1210
    %1244 = vmatprep.mubr.bf16.mxu0 %v1192
    %1245 = vmatmul.mubr.bf16.gmra.mrb[0].mxu0 %v1191
    %v1246 = vpop.f32.mrb[0].mxu0
    %v1247 = vadd.f32 %v1211, %v1246
    %v1248 = vpop.f32.mrb[0].mxu0
    %v1249 = vpop.f32.mrb[0].mxu0
    %v1250 = vpop.f32.mrb[0].mxu0
    %1251 = vdwg.mxu0
    %v1252 = vpack.c.bf16 %v1247, %v1247
    %v1253 = vmul.bf16 %v1252, 1045249613
    %v1254 = vmax.bf16 %v1252, %v1253
    %s1255 = smul.u32 4, 16
    %s1256 = smul.u32 %s1255, 4
    %s1257 = sshll.u32 %s1256, 4
    %1258 = dma.done %s243, %s1257
    %v1259 = vld [vmem:[#allocation2 + $0xf00] sm:$0xff]
    %v1260 = vld [vmem:[#allocation2 + $0xf20] sm:$0xff]
    %v1261 = vld [vmem:[#allocation2 + $0xf40] sm:$0xff]
    %v1262 = vld [vmem:[#allocation2 + $0xf60] sm:$0xff]
    %v1263 = vld [vmem:[#allocation2 + $0xf80] sm:$0xff]
    %v1264 = vld [vmem:[#allocation2 + $0xfa0] sm:$0xff]
    %v1265 = vld [vmem:[#allocation2 + $0xfc0] sm:$0xff]
    %v1266 = vld [vmem:[#allocation2 + $0xfe0] sm:$0xff]
    %v1267 = vld [vmem:[#allocation9 + $0x5] ss:$0 sm:$0xff]
    %1268 = vmatprep.subr.bf16.mxu0 0
    %1269 = vmatpush1.bf16.msra.mxu0 %v1259
    %1270 = vmatprep.subr.bf16.mxu0 0
    %1271 = vmatpush1.bf16.msra.mxu0 %v1260
    %1272 = vmatprep.subr.bf16.mxu0 0
    %1273 = vmatpush1.bf16.msra.mxu0 %v1261
    %1274 = vmatprep.subr.bf16.mxu0 0
    %1275 = vmatpush1.bf16.msra.mxu0 %v1262
    %1276 = vmatprep.subr.bf16.mxu0 0
    %1277 = vmatpush1.bf16.msra.mxu0 %v1263
    %1278 = vmatprep.subr.bf16.mxu0 0
    %1279 = vmatpush1.bf16.msra.mxu0 %v1264
    %1280 = vmatprep.subr.bf16.mxu0 0
    %1281 = vmatpush1.bf16.msra.mxu0 %v1265
    %1282 = vmatprep.subr.bf16.mxu0 0
    %1283 = vmatpush1.bf16.msra.mxu0 %v1266
    %1284 = vmatprep.subr.bf16.mxu0 0
    %1285 = vmatpush1.bf16.msra.mxu0 0
    %1286 = vmatprep.subr.bf16.mxu0 0
    %1287 = vmatpush1.bf16.msra.mxu0 0
    %1288 = vmatprep.subr.bf16.mxu0 0
    %1289 = vmatpush1.bf16.msra.mxu0 0
    %1290 = vmatprep.subr.bf16.mxu0 0
    %1291 = vmatpush1.bf16.msra.mxu0 0
    %1292 = vmatprep.subr.bf16.mxu0 0
    %1293 = vmatpush1.bf16.msra.mxu0 0
    %1294 = vmatprep.subr.bf16.mxu0 0
    %1295 = vmatpush1.bf16.msra.mxu0 0
    %1296 = vmatprep.subr.bf16.mxu0 0
    %1297 = vmatpush1.bf16.msra.mxu0 0
    %1298 = vmatprep.subr.bf16.mxu0 0
    %1299 = vmatpush1.bf16.msra.mxu0 0
    %1300 = vmatprep.mubr.bf16.mxu0 0
    %1301 = vmatmul.mubr.bf16.gmra.mrb[0].mxu0 %v1254
    %v1302 = vpop.f32.mrb[0].mxu0
    %v1303 = vadd.f32 %v1267, %v1302
    %v1304 = vpop.f32.mrb[0].mxu0
    %v1305 = vpop.f32.mrb[0].mxu0
    %v1306 = vpop.f32.mrb[0].mxu0
    %1307 = vdwg.mxu0
    %v1308 = vld [vmem:[#allocation7] sm:$0xff]
    %1310 = vrot.lane.b32.xlu0 %v1308, 32
    %v1311 = vpop.permute.xlu0 %1310
    %v1313 = vmul.f32 %v1303, %v1311
    %1315 = vrot.lane.b32.xlu0 %v1313, 96
    %v1316 = vpop.permute.xlu0 %1315
    %v1318 = vadd.f32 %v1303, %v1316
    %s1319 = smul.u32 4, 4
    %s1320 = smul.u32 %s1319, 4
    %s1321 = sshll.u32 %s1320, 4
    %1322 = dma.done %s280, %s1321
    %v1323 = vld [vmem:[#allocation2 + $0x1000] sm:$0xff]
    %v1324 = vld [vmem:[#allocation2 + $0x1020] sm:$0xff]
    %v1325 = vld [vmem:[#allocation9 + $0x6] ss:$0 sm:$0xff]
    %v1326 = vpack.c.bf16 %v1318, %v1318
    %vm1327 = vcmask 261120
    %v1329 = vsel %vm1327, %v1326, 0
    %1331 = vmatprep.subr.bf16.mxu0 0
    %1332 = vmatpush1.bf16.msra.mxu0 %v1323
    %1333 = vmatprep.subr.bf16.mxu0 0
    %1334 = vmatpush1.bf16.msra.mxu0 %v1324
    %1335 = vmatprep.subr.bf16.mxu0 0
    %1336 = vmatpush1.bf16.msra.mxu0 0
    %1337 = vmatprep.subr.bf16.mxu0 0
    %1338 = vmatpush1.bf16.msra.mxu0 0
    %1339 = vmatprep.subr.bf16.mxu0 0
    %1340 = vmatpush1.bf16.msra.mxu0 0
    %1341 = vmatprep.subr.bf16.mxu0 0
    %1342 = vmatpush1.bf16.msra.mxu0 0
    %1343 = vmatprep.subr.bf16.mxu0 0
    %1344 = vmatpush1.bf16.msra.mxu0 0
    %1345 = vmatprep.subr.bf16.mxu0 0
    %1346 = vmatpush1.bf16.msra.mxu0 0
    %1347 = vmatprep.subr.bf16.mxu0 0
    %1348 = vmatpush1.bf16.msra.mxu0 0
    %1349 = vmatprep.subr.bf16.mxu0 0
    %1350 = vmatpush1.bf16.msra.mxu0 0
    %1351 = vmatprep.subr.bf16.mxu0 0
    %1352 = vmatpush1.bf16.msra.mxu0 0
    %1353 = vmatprep.subr.bf16.mxu0 0
    %1354 = vmatpush1.bf16.msra.mxu0 0
    %1355 = vmatprep.subr.bf16.mxu0 0
    %1356 = vmatpush1.bf16.msra.mxu0 0
    %1357 = vmatprep.subr.bf16.mxu0 0
    %1358 = vmatpush1.bf16.msra.mxu0 0
    %1359 = vmatprep.subr.bf16.mxu0 0
    %1360 = vmatpush1.bf16.msra.mxu0 0
    %1361 = vmatprep.subr.bf16.mxu0 0
    %1362 = vmatpush1.bf16.msra.mxu0 0
    %1363 = vmatprep.mubr.bf16.mxu0 0
    %1364 = vmatmul.mubr.bf16.gmra.mrb[0].mxu0 %v1329
    %v1365 = vpop.f32.mrb[0].mxu0
    %v1366 = vadd.f32 %v1325, %v1365
    %v1367 = vpop.f32.mrb[0].mxu0
    %v1368 = vpop.f32.mrb[0].mxu0
    %v1369 = vpop.f32.mrb[0].mxu0
    %1370 = vdwg.mxu0
    %v1371 = vpack.c.bf16 %v1366, %v1366
    %v1372 = vmul.bf16 %v1371, 1045249613
    %v1373 = vmax.bf16 %v1371, %v1372
    %v1374 = vld [vmem:[#allocation2 + $0xf08] sm:$0xff]
    %v1375 = vld [vmem:[#allocation2 + $0xf10] sm:$0xff]
    %v1376 = vld [vmem:[#allocation2 + $0xf28] sm:$0xff]
    %v1377 = vld [vmem:[#allocation2 + $0xf30] sm:$0xff]
    %v1378 = vld [vmem:[#allocation2 + $0xf48] sm:$0xff]
    %v1379 = vld [vmem:[#allocation2 + $0xf50] sm:$0xff]
    %v1380 = vld [vmem:[#allocation2 + $0xf68] sm:$0xff]
    %v1381 = vld [vmem:[#allocation2 + $0xf70] sm:$0xff]
    %v1382 = vld [vmem:[#allocation2 + $0xf88] sm:$0xff]
    %v1383 = vld [vmem:[#allocation2 + $0xf90] sm:$0xff]
    %v1384 = vld [vmem:[#allocation2 + $0xfa8] sm:$0xff]
    %v1385 = vld [vmem:[#allocation2 + $0xfb0] sm:$0xff]
    %v1386 = vld [vmem:[#allocation2 + $0xfc8] sm:$0xff]
    %v1387 = vld [vmem:[#allocation2 + $0xfd0] sm:$0xff]
    %v1388 = vld [vmem:[#allocation2 + $0xfe8] sm:$0xff]
    %v1389 = vld [vmem:[#allocation2 + $0xff0] sm:$0xff]
    %s1390 = scalar_lea.vmem [#allocation9], 7
    %v1391 = vld [vmem:[%s1390] ss:$8 sm:$0x3]
    %v1393 = vlaneseq
    %v1394 = vshrl.u32 %v1393, 7
    %v1395 = vsub.s32 0, %v1394
    %v1396 = vrot.slane %v1391, %v1395
    %v1397 = vlaneseq
    %v1398 = vshrl.u32 %v1397, 7
    %v1399 = vsub.s32 1, %v1398
    %v1400 = vrot.slane %v1391, %v1399
    %1403 = vmatprep.subr.bf16.mxu0 %v1375
    %1404 = vmatpush1.bf16.msra.mxu0 %v1374
    %1405 = vmatprep.subr.bf16.mxu0 %v1377
    %1406 = vmatpush1.bf16.msra.mxu0 %v1376
    %1407 = vmatprep.subr.bf16.mxu0 %v1379
    %1408 = vmatpush1.bf16.msra.mxu0 %v1378
    %1409 = vmatprep.subr.bf16.mxu0 %v1381
    %1410 = vmatpush1.bf16.msra.mxu0 %v1380
    %1411 = vmatprep.subr.bf16.mxu0 %v1383
    %1412 = vmatpush1.bf16.msra.mxu0 %v1382
    %1413 = vmatprep.subr.bf16.mxu0 %v1385
    %1414 = vmatpush1.bf16.msra.mxu0 %v1384
    %1415 = vmatprep.subr.bf16.mxu0 %v1387
    %1416 = vmatpush1.bf16.msra.mxu0 %v1386
    %1417 = vmatprep.subr.bf16.mxu0 %v1389
    %1418 = vmatpush1.bf16.msra.mxu0 %v1388
    %1419 = vmatprep.subr.bf16.mxu0 0
    %1420 = vmatpush1.bf16.msra.mxu0 0
    %1421 = vmatprep.subr.bf16.mxu0 0
    %1422 = vmatpush1.bf16.msra.mxu0 0
    %1423 = vmatprep.subr.bf16.mxu0 0
    %1424 = vmatpush1.bf16.msra.mxu0 0
    %1425 = vmatprep.subr.bf16.mxu0 0
    %1426 = vmatpush1.bf16.msra.mxu0 0
    %1427 = vmatprep.subr.bf16.mxu0 0
    %1428 = vmatpush1.bf16.msra.mxu0 0
    %1429 = vmatprep.subr.bf16.mxu0 0
    %1430 = vmatpush1.bf16.msra.mxu0 0
    %1431 = vmatprep.subr.bf16.mxu0 0
    %1432 = vmatpush1.bf16.msra.mxu0 0
    %1433 = vmatprep.subr.bf16.mxu0 0
    %1434 = vmatpush1.bf16.msra.mxu0 0
    %1435 = vmatprep.mubr.bf16.mxu0 0
    %1436 = vmatmul.mubr.bf16.gmra.mrb[0].mxu0 %v1373
    %v1437 = vpop.f32.mrb[0].mxu0
    %v1438 = vadd.f32 %v1396, %v1437
    %v1439 = vpop.f32.mrb[0].mxu0
    %v1440 = vadd.f32 %v1400, %v1439
    %v1441 = vpop.f32.mrb[0].mxu0
    %v1442 = vpop.f32.mrb[0].mxu0
    %1443 = vdwg.mxu0
    %v1444 = vpack.c.bf16 %v1438, %v1438
    %v1445 = vpack.c.bf16 %v1440, %v1440
    %v1446 = vmul.bf16 %v1444, 1045249613
    %v1447 = vmul.bf16 %v1445, 1045249613
    %v1448 = vmax.bf16 %v1444, %v1446
    %v1449 = vmax.bf16 %v1445, %v1447
    %s1450 = sshll.u32 %s511, 4
    %1451 = dma.done %s317, %s1450
    %v1452 = vld [vmem:[#allocation2 + $0x1040] sm:$0xff]
    %v1453 = vld [vmem:[#allocation2 + $0x1048] sm:$0xff]
    %v1454 = vld [vmem:[#allocation2 + $0x1050] sm:$0xff]
    %v1455 = vld [vmem:[#allocation2 + $0x1058] sm:$0xff]
    %v1456 = vld [vmem:[#allocation2 + $0x1060] sm:$0xff]
    %v1457 = vld [vmem:[#allocation2 + $0x1068] sm:$0xff]
    %v1458 = vld [vmem:[#allocation2 + $0x1070] sm:$0xff]
    %v1459 = vld [vmem:[#allocation2 + $0x1078] sm:$0xff]
    %v1460 = vld [vmem:[#allocation2 + $0x1080] sm:$0xff]
    %v1461 = vld [vmem:[#allocation2 + $0x1088] sm:$0xff]
    %v1462 = vld [vmem:[#allocation2 + $0x1090] sm:$0xff]
    %v1463 = vld [vmem:[#allocation2 + $0x1098] sm:$0xff]
    %v1464 = vld [vmem:[#allocation2 + $0x10a0] sm:$0xff]
    %v1465 = vld [vmem:[#allocation2 + $0x10a8] sm:$0xff]
    %v1466 = vld [vmem:[#allocation2 + $0x10b0] sm:$0xff]
    %v1467 = vld [vmem:[#allocation2 + $0x10b8] sm:$0xff]
    %v1468 = vld [vmem:[#allocation2 + $0x10c0] sm:$0xff]
    %v1469 = vld [vmem:[#allocation2 + $0x10c8] sm:$0xff]
    %v1470 = vld [vmem:[#allocation2 + $0x10d0] sm:$0xff]
    %v1471 = vld [vmem:[#allocation2 + $0x10d8] sm:$0xff]
    %v1472 = vld [vmem:[#allocation2 + $0x10e0] sm:$0xff]
    %v1473 = vld [vmem:[#allocation2 + $0x10e8] sm:$0xff]
    %v1474 = vld [vmem:[#allocation2 + $0x10f0] sm:$0xff]
    %v1475 = vld [vmem:[#allocation2 + $0x10f8] sm:$0xff]
    %v1476 = vld [vmem:[#allocation2 + $0x1100] sm:$0xff]
    %v1477 = vld [vmem:[#allocation2 + $0x1108] sm:$0xff]
    %v1478 = vld [vmem:[#allocation2 + $0x1110] sm:$0xff]
    %v1479 = vld [vmem:[#allocation2 + $0x1118] sm:$0xff]
    %v1480 = vld [vmem:[#allocation2 + $0x1120] sm:$0xff]
    %v1481 = vld [vmem:[#allocation2 + $0x1128] sm:$0xff]
    %v1482 = vld [vmem:[#allocation2 + $0x1130] sm:$0xff]
    %v1483 = vld [vmem:[#allocation2 + $0x1138] sm:$0xff]
    %v1484 = vld [vmem:[#allocation2 + $0x1140] sm:$0xff]
    %v1485 = vld [vmem:[#allocation2 + $0x1148] sm:$0xff]
    %v1486 = vld [vmem:[#allocation2 + $0x1150] sm:$0xff]
    %v1487 = vld [vmem:[#allocation2 + $0x1158] sm:$0xff]
    %v1488 = vld [vmem:[#allocation2 + $0x1160] sm:$0xff]
    %v1489 = vld [vmem:[#allocation2 + $0x1168] sm:$0xff]
    %v1490 = vld [vmem:[#allocation2 + $0x1170] sm:$0xff]
    %v1491 = vld [vmem:[#allocation2 + $0x1178] sm:$0xff]
    %v1492 = vld [vmem:[#allocation2 + $0x1180] sm:$0xff]
    %v1493 = vld [vmem:[#allocation2 + $0x1188] sm:$0xff]
    %v1494 = vld [vmem:[#allocation2 + $0x1190] sm:$0xff]
    %v1495 = vld [vmem:[#allocation2 + $0x1198] sm:$0xff]
    %v1496 = vld [vmem:[#allocation2 + $0x11a0] sm:$0xff]
    %v1497 = vld [vmem:[#allocation2 + $0x11a8] sm:$0xff]
    %v1498 = vld [vmem:[#allocation2 + $0x11b0] sm:$0xff]
    %v1499 = vld [vmem:[#allocation2 + $0x11b8] sm:$0xff]
    %v1500 = vld [vmem:[#allocation2 + $0x11c0] sm:$0xff]
    %v1501 = vld [vmem:[#allocation2 + $0x11c8] sm:$0xff]
    %v1502 = vld [vmem:[#allocation2 + $0x11d0] sm:$0xff]
    %v1503 = vld [vmem:[#allocation2 + $0x11d8] sm:$0xff]
    %v1504 = vld [vmem:[#allocation2 + $0x11e0] sm:$0xff]
    %v1505 = vld [vmem:[#allocation2 + $0x11e8] sm:$0xff]
    %v1506 = vld [vmem:[#allocation2 + $0x11f0] sm:$0xff]
    %v1507 = vld [vmem:[#allocation2 + $0x11f8] sm:$0xff]
    %v1508 = vld [vmem:[#allocation2 + $0x1200] sm:$0xff]
    %v1509 = vld [vmem:[#allocation2 + $0x1208] sm:$0xff]
    %v1510 = vld [vmem:[#allocation2 + $0x1210] sm:$0xff]
    %v1511 = vld [vmem:[#allocation2 + $0x1218] sm:$0xff]
    %v1512 = vld [vmem:[#allocation2 + $0x1220] sm:$0xff]
    %v1513 = vld [vmem:[#allocation2 + $0x1228] sm:$0xff]
    %v1514 = vld [vmem:[#allocation2 + $0x1230] sm:$0xff]
    %v1515 = vld [vmem:[#allocation2 + $0x1238] sm:$0xff]
    %s1516 = scalar_lea.vmem [#allocation9], 32
    %v1517 = vld [vmem:[%s1516] ss:$8 sm:$0xf]
    %v1519 = vlaneseq
    %v1520 = vshrl.u32 %v1519, 7
    %v1521 = vsub.s32 0, %v1520
    %v1522 = vrot.slane %v1517, %v1521
    %v1523 = vlaneseq
    %v1524 = vshrl.u32 %v1523, 7
    %v1525 = vsub.s32 1, %v1524
    %v1526 = vrot.slane %v1517, %v1525
    %v1527 = vlaneseq
    %v1528 = vshrl.u32 %v1527, 7
    %v1529 = vsub.s32 2, %v1528
    %v1530 = vrot.slane %v1517, %v1529
    %v1531 = vlaneseq
    %v1532 = vshrl.u32 %v1531, 7
    %v1533 = vsub.s32 3, %v1532
    %v1534 = vrot.slane %v1517, %v1533
    %1539 = vmatprep.subr.bf16.mxu0 %v1453
    %1540 = vmatpush1.bf16.msra.mxu0 %v1452
    %1541 = vmatprep.subr.bf16.mxu0 %v1457
    %1542 = vmatpush1.bf16.msra.mxu0 %v1456
    %1543 = vmatprep.subr.bf16.mxu0 %v1461
    %1544 = vmatpush1.bf16.msra.mxu0 %v1460
    %1545 = vmatprep.subr.bf16.mxu0 %v1465
    %1546 = vmatpush1.bf16.msra.mxu0 %v1464
    %1547 = vmatprep.subr.bf16.mxu0 %v1469
    %1548 = vmatpush1.bf16.msra.mxu0 %v1468
    %1549 = vmatprep.subr.bf16.mxu0 %v1473
    %1550 = vmatpush1.bf16.msra.mxu0 %v1472
    %1551 = vmatprep.subr.bf16.mxu0 %v1477
    %1552 = vmatpush1.bf16.msra.mxu0 %v1476
    %1553 = vmatprep.subr.bf16.mxu0 %v1481
    %1554 = vmatpush1.bf16.msra.mxu0 %v1480
    %1555 = vmatprep.subr.bf16.mxu0 %v1485
    %1556 = vmatpush1.bf16.msra.mxu0 %v1484
    %1557 = vmatprep.subr.bf16.mxu0 %v1489
    %1558 = vmatpush1.bf16.msra.mxu0 %v1488
    %1559 = vmatprep.subr.bf16.mxu0 %v1493
    %1560 = vmatpush1.bf16.msra.mxu0 %v1492
    %1561 = vmatprep.subr.bf16.mxu0 %v1497
    %1562 = vmatpush1.bf16.msra.mxu0 %v1496
    %1563 = vmatprep.subr.bf16.mxu0 %v1501
    %1564 = vmatpush1.bf16.msra.mxu0 %v1500
    %1565 = vmatprep.subr.bf16.mxu0 %v1505
    %1566 = vmatpush1.bf16.msra.mxu0 %v1504
    %1567 = vmatprep.subr.bf16.mxu0 %v1509
    %1568 = vmatpush1.bf16.msra.mxu0 %v1508
    %1569 = vmatprep.subr.bf16.mxu0 %v1513
    %1570 = vmatpush1.bf16.msra.mxu0 %v1512
    %1571 = vmatprep.mubr.bf16.mxu0 %v1449
    %1572 = vmatmul.mubr.bf16.gmra.mrb[0].mxu0 %v1448
    %v1573 = vpop.f32.mrb[0].mxu0
    %v1574 = vadd.f32 %v1522, %v1573
    %v1575 = vpop.f32.mrb[0].mxu0
    %v1576 = vadd.f32 %v1526, %v1575
    %v1577 = vpop.f32.mrb[0].mxu0
    %v1578 = vpop.f32.mrb[0].mxu0
    %1579 = vdwg.mxu0
    %1580 = vmatprep.subr.bf16.mxu0 %v1455
    %1581 = vmatpush1.bf16.msra.mxu0 %v1454
    %1582 = vmatprep.subr.bf16.mxu0 %v1459
    %1583 = vmatpush1.bf16.msra.mxu0 %v1458
    %1584 = vmatprep.subr.bf16.mxu0 %v1463
    %1585 = vmatpush1.bf16.msra.mxu0 %v1462
    %1586 = vmatprep.subr.bf16.mxu0 %v1467
    %1587 = vmatpush1.bf16.msra.mxu0 %v1466
    %1588 = vmatprep.subr.bf16.mxu0 %v1471
    %1589 = vmatpush1.bf16.msra.mxu0 %v1470
    %1590 = vmatprep.subr.bf16.mxu0 %v1475
    %1591 = vmatpush1.bf16.msra.mxu0 %v1474
    %1592 = vmatprep.subr.bf16.mxu0 %v1479
    %1593 = vmatpush1.bf16.msra.mxu0 %v1478
    %1594 = vmatprep.subr.bf16.mxu0 %v1483
    %1595 = vmatpush1.bf16.msra.mxu0 %v1482
    %1596 = vmatprep.subr.bf16.mxu0 %v1487
    %1597 = vmatpush1.bf16.msra.mxu0 %v1486
    %1598 = vmatprep.subr.bf16.mxu0 %v1491
    %1599 = vmatpush1.bf16.msra.mxu0 %v1490
    %1600 = vmatprep.subr.bf16.mxu0 %v1495
    %1601 = vmatpush1.bf16.msra.mxu0 %v1494
    %1602 = vmatprep.subr.bf16.mxu0 %v1499
    %1603 = vmatpush1.bf16.msra.mxu0 %v1498
    %1604 = vmatprep.subr.bf16.mxu0 %v1503
    %1605 = vmatpush1.bf16.msra.mxu0 %v1502
    %1606 = vmatprep.subr.bf16.mxu0 %v1507
    %1607 = vmatpush1.bf16.msra.mxu0 %v1506
    %1608 = vmatprep.subr.bf16.mxu0 %v1511
    %1609 = vmatpush1.bf16.msra.mxu0 %v1510
    %1610 = vmatprep.subr.bf16.mxu0 %v1515
    %1611 = vmatpush1.bf16.msra.mxu0 %v1514
    %1612 = vmatprep.mubr.bf16.mxu0 %v1449
    %1613 = vmatmul.mubr.bf16.gmra.mrb[0].mxu0 %v1448
    %v1614 = vpop.f32.mrb[0].mxu0
    %v1615 = vadd.f32 %v1530, %v1614
    %v1616 = vpop.f32.mrb[0].mxu0
    %v1617 = vadd.f32 %v1534, %v1616
    %v1618 = vpop.f32.mrb[0].mxu0
    %v1619 = vpop.f32.mrb[0].mxu0
    %1620 = vdwg.mxu0
    %v1621 = vpack.c.bf16 %v1574, %v1574
    %v1622 = vpack.c.bf16 %v1576, %v1576
    %v1623 = vpack.c.bf16 %v1615, %v1615
    %v1624 = vpack.c.bf16 %v1617, %v1617
    %v1625 = vmul.bf16 %v1621, 1045249613
    %v1626 = vmul.bf16 %v1622, 1045249613
    %v1627 = vmul.bf16 %v1623, 1045249613
    %v1628 = vmul.bf16 %v1624, 1045249613
    %v1629 = vmax.bf16 %v1621, %v1625
    %v1630 = vmax.bf16 %v1622, %v1626
    %v1631 = vmax.bf16 %v1623, %v1627
    %v1632 = vmax.bf16 %v1624, %v1628
    %v1633 = vld [vmem:[#allocation2 + $0x910] sm:$0xff]
    %v1634 = vld [vmem:[#allocation2 + $0x918] sm:$0xff]
    %v1635 = vld [vmem:[#allocation2 + $0x930] sm:$0xff]
    %v1636 = vld [vmem:[#allocation2 + $0x938] sm:$0xff]
    %v1637 = vld [vmem:[#allocation2 + $0x950] sm:$0xff]
    %v1638 = vld [vmem:[#allocation2 + $0x958] sm:$0xff]
    %v1639 = vld [vmem:[#allocation2 + $0x970] sm:$0xff]
    %v1640 = vld [vmem:[#allocation2 + $0x978] sm:$0xff]
    %v1641 = vld [vmem:[#allocation2 + $0x990] sm:$0xff]
    %v1642 = vld [vmem:[#allocation2 + $0x998] sm:$0xff]
    %v1643 = vld [vmem:[#allocation2 + $0x9b0] sm:$0xff]
    %v1644 = vld [vmem:[#allocation2 + $0x9b8] sm:$0xff]
    %v1645 = vld [vmem:[#allocation2 + $0x9d0] sm:$0xff]
    %v1646 = vld [vmem:[#allocation2 + $0x9d8] sm:$0xff]
    %v1647 = vld [vmem:[#allocation2 + $0x9f0] sm:$0xff]
    %v1648 = vld [vmem:[#allocation2 + $0x9f8] sm:$0xff]
    %v1649 = vld [vmem:[#allocation2 + $0xa10] sm:$0xff]
    %v1650 = vld [vmem:[#allocation2 + $0xa18] sm:$0xff]
    %v1651 = vld [vmem:[#allocation2 + $0xa30] sm:$0xff]
    %v1652 = vld [vmem:[#allocation2 + $0xa38] sm:$0xff]
    %v1653 = vld [vmem:[#allocation2 + $0xa50] sm:$0xff]
    %v1654 = vld [vmem:[#allocation2 + $0xa58] sm:$0xff]
    %v1655 = vld [vmem:[#allocation2 + $0xa70] sm:$0xff]
    %v1656 = vld [vmem:[#allocation2 + $0xa78] sm:$0xff]
    %v1657 = vld [vmem:[#allocation2 + $0xa90] sm:$0xff]
    %v1658 = vld [vmem:[#allocation2 + $0xa98] sm:$0xff]
    %v1659 = vld [vmem:[#allocation2 + $0xab0] sm:$0xff]
    %v1660 = vld [vmem:[#allocation2 + $0xab8] sm:$0xff]
    %v1661 = vld [vmem:[#allocation2 + $0xad0] sm:$0xff]
    %v1662 = vld [vmem:[#allocation2 + $0xad8] sm:$0xff]
    %v1663 = vld [vmem:[#allocation2 + $0xaf0] sm:$0xff]
    %v1664 = vld [vmem:[#allocation2 + $0xaf8] sm:$0xff]
    %v1665 = vld [vmem:[#allocation2 + $0xb10] sm:$0xff]
    %v1666 = vld [vmem:[#allocation2 + $0xb18] sm:$0xff]
    %v1667 = vld [vmem:[#allocation2 + $0xb30] sm:$0xff]
    %v1668 = vld [vmem:[#allocation2 + $0xb38] sm:$0xff]
    %v1669 = vld [vmem:[#allocation2 + $0xb50] sm:$0xff]
    %v1670 = vld [vmem:[#allocation2 + $0xb58] sm:$0xff]
    %v1671 = vld [vmem:[#allocation2 + $0xb70] sm:$0xff]
    %v1672 = vld [vmem:[#allocation2 + $0xb78] sm:$0xff]
    %v1673 = vld [vmem:[#allocation2 + $0xb90] sm:$0xff]
    %v1674 = vld [vmem:[#allocation2 + $0xb98] sm:$0xff]
    %v1675 = vld [vmem:[#allocation2 + $0xbb0] sm:$0xff]
    %v1676 = vld [vmem:[#allocation2 + $0xbb8] sm:$0xff]
    %v1677 = vld [vmem:[#allocation2 + $0xbd0] sm:$0xff]
    %v1678 = vld [vmem:[#allocation2 + $0xbd8] sm:$0xff]
    %v1679 = vld [vmem:[#allocation2 + $0xbf0] sm:$0xff]
    %v1680 = vld [vmem:[#allocation2 + $0xbf8] sm:$0xff]
    %v1681 = vld [vmem:[#allocation2 + $0xc10] sm:$0xff]
    %v1682 = vld [vmem:[#allocation2 + $0xc18] sm:$0xff]
    %v1683 = vld [vmem:[#allocation2 + $0xc30] sm:$0xff]
    %v1684 = vld [vmem:[#allocation2 + $0xc38] sm:$0xff]
    %v1685 = vld [vmem:[#allocation2 + $0xc50] sm:$0xff]
    %v1686 = vld [vmem:[#allocation2 + $0xc58] sm:$0xff]
    %v1687 = vld [vmem:[#allocation2 + $0xc70] sm:$0xff]
    %v1688 = vld [vmem:[#allocation2 + $0xc78] sm:$0xff]
    %v1689 = vld [vmem:[#allocation2 + $0xc90] sm:$0xff]
    %v1690 = vld [vmem:[#allocation2 + $0xc98] sm:$0xff]
    %v1691 = vld [vmem:[#allocation2 + $0xcb0] sm:$0xff]
    %v1692 = vld [vmem:[#allocation2 + $0xcb8] sm:$0xff]
    %v1693 = vld [vmem:[#allocation2 + $0xcd0] sm:$0xff]
    %v1694 = vld [vmem:[#allocation2 + $0xcd8] sm:$0xff]
    %v1695 = vld [vmem:[#allocation2 + $0xcf0] sm:$0xff]
    %v1696 = vld [vmem:[#allocation2 + $0xcf8] sm:$0xff]
    %s1697 = scalar_lea.vmem [#allocation9], 33
    %v1698 = vld [vmem:[%s1697] ss:$8 sm:$0x3]
    %v1700 = vlaneseq
    %v1701 = vshrl.u32 %v1700, 7
    %v1702 = vsub.s32 0, %v1701
    %v1703 = vrot.slane %v1698, %v1702
    %v1704 = vlaneseq
    %v1705 = vshrl.u32 %v1704, 7
    %v1706 = vsub.s32 1, %v1705
    %v1707 = vrot.slane %v1698, %v1706
    %1710 = vmatprep.subr.bf16.mxu0 %v1634
    %1711 = vmatpush1.bf16.msra.mxu0 %v1633
    %1712 = vmatprep.subr.bf16.mxu0 %v1636
    %1713 = vmatpush1.bf16.msra.mxu0 %v1635
    %1714 = vmatprep.subr.bf16.mxu0 %v1638
    %1715 = vmatpush1.bf16.msra.mxu0 %v1637
    %1716 = vmatprep.subr.bf16.mxu0 %v1640
    %1717 = vmatpush1.bf16.msra.mxu0 %v1639
    %1718 = vmatprep.subr.bf16.mxu0 %v1642
    %1719 = vmatpush1.bf16.msra.mxu0 %v1641
    %1720 = vmatprep.subr.bf16.mxu0 %v1644
    %1721 = vmatpush1.bf16.msra.mxu0 %v1643
    %1722 = vmatprep.subr.bf16.mxu0 %v1646
    %1723 = vmatpush1.bf16.msra.mxu0 %v1645
    %1724 = vmatprep.subr.bf16.mxu0 %v1648
    %1725 = vmatpush1.bf16.msra.mxu0 %v1647
    %1726 = vmatprep.subr.bf16.mxu0 %v1650
    %1727 = vmatpush1.bf16.msra.mxu0 %v1649
    %1728 = vmatprep.subr.bf16.mxu0 %v1652
    %1729 = vmatpush1.bf16.msra.mxu0 %v1651
    %1730 = vmatprep.subr.bf16.mxu0 %v1654
    %1731 = vmatpush1.bf16.msra.mxu0 %v1653
    %1732 = vmatprep.subr.bf16.mxu0 %v1656
    %1733 = vmatpush1.bf16.msra.mxu0 %v1655
    %1734 = vmatprep.subr.bf16.mxu0 %v1658
    %1735 = vmatpush1.bf16.msra.mxu0 %v1657
    %1736 = vmatprep.subr.bf16.mxu0 %v1660
    %1737 = vmatpush1.bf16.msra.mxu0 %v1659
    %1738 = vmatprep.subr.bf16.mxu0 %v1662
    %1739 = vmatpush1.bf16.msra.mxu0 %v1661
    %1740 = vmatprep.subr.bf16.mxu0 %v1664
    %1741 = vmatpush1.bf16.msra.mxu0 %v1663
    %1742 = vmatprep.mubr.bf16.mxu0 %v1630
    %1743 = vmatmul.mubr.bf16.gmra.mrb[0].mxu0 %v1629
    %v1744 = vpop.f32.mrb[0].mxu0
    %v1745 = vadd.f32 %v1703, %v1744
    %v1746 = vpop.f32.mrb[0].mxu0
    %v1747 = vadd.f32 %v1707, %v1746
    %v1748 = vpop.f32.mrb[0].mxu0
    %v1749 = vpop.f32.mrb[0].mxu0
    %1750 = vdwg.mxu0
    %1751 = vmatprep.subr.bf16.mxu0 %v1666
    %1752 = vmatpush1.bf16.msra.mxu0 %v1665
    %1753 = vmatprep.subr.bf16.mxu0 %v1668
    %1754 = vmatpush1.bf16.msra.mxu0 %v1667
    %1755 = vmatprep.subr.bf16.mxu0 %v1670
    %1756 = vmatpush1.bf16.msra.mxu0 %v1669
    %1757 = vmatprep.subr.bf16.mxu0 %v1672
    %1758 = vmatpush1.bf16.msra.mxu0 %v1671
    %1759 = vmatprep.subr.bf16.mxu0 %v1674
    %1760 = vmatpush1.bf16.msra.mxu0 %v1673
    %1761 = vmatprep.subr.bf16.mxu0 %v1676
    %1762 = vmatpush1.bf16.msra.mxu0 %v1675
    %1763 = vmatprep.subr.bf16.mxu0 %v1678
    %1764 = vmatpush1.bf16.msra.mxu0 %v1677
    %1765 = vmatprep.subr.bf16.mxu0 %v1680
    %1766 = vmatpush1.bf16.msra.mxu0 %v1679
    %1767 = vmatprep.subr.bf16.mxu0 %v1682
    %1768 = vmatpush1.bf16.msra.mxu0 %v1681
    %1769 = vmatprep.subr.bf16.mxu0 %v1684
    %1770 = vmatpush1.bf16.msra.mxu0 %v1683
    %1771 = vmatprep.subr.bf16.mxu0 %v1686
    %1772 = vmatpush1.bf16.msra.mxu0 %v1685
    %1773 = vmatprep.subr.bf16.mxu0 %v1688
    %1774 = vmatpush1.bf16.msra.mxu0 %v1687
    %1775 = vmatprep.subr.bf16.mxu0 %v1690
    %1776 = vmatpush1.bf16.msra.mxu0 %v1689
    %1777 = vmatprep.subr.bf16.mxu0 %v1692
    %1778 = vmatpush1.bf16.msra.mxu0 %v1691
    %1779 = vmatprep.subr.bf16.mxu0 %v1694
    %1780 = vmatpush1.bf16.msra.mxu0 %v1693
    %1781 = vmatprep.subr.bf16.mxu0 %v1696
    %1782 = vmatpush1.bf16.msra.mxu0 %v1695
    %1783 = vmatprep.mubr.bf16.mxu0 %v1632
    %1784 = vmatmul.mubr.bf16.gmra.mrb[0].mxu0 %v1631
    %v1785 = vpop.f32.mrb[0].mxu0
    %v1786 = vadd.f32 %v1745, %v1785
    %v1787 = vpop.f32.mrb[0].mxu0
    %v1788 = vadd.f32 %v1747, %v1787
    %v1789 = vpop.f32.mrb[0].mxu0
    %v1790 = vpop.f32.mrb[0].mxu0
    %1791 = vdwg.mxu0
    %v1792 = vpack.c.bf16 %v1786, %v1786
    %v1793 = vpack.c.bf16 %v1788, %v1788
    %v1794 = vmul.bf16 %v1792, 1045249613
    %v1795 = vmul.bf16 %v1793, 1045249613
    %v1796 = vmax.bf16 %v1792, %v1794
    %v1797 = vmax.bf16 %v1793, %v1795
    %v1798 = vld [vmem:[#allocation2 + $0xd08] sm:$0xff]
    %v1799 = vld [vmem:[#allocation2 + $0xd10] sm:$0xff]
    %v1800 = vld [vmem:[#allocation2 + $0xd18] sm:$0xff]
    %v1801 = vld [vmem:[#allocation2 + $0xd28] sm:$0xff]
    %v1802 = vld [vmem:[#allocation2 + $0xd30] sm:$0xff]
    %v1803 = vld [vmem:[#allocation2 + $0xd38] sm:$0xff]
    %v1804 = vld [vmem:[#allocation2 + $0xd48] sm:$0xff]
    %v1805 = vld [vmem:[#allocation2 + $0xd50] sm:$0xff]
    %v1806 = vld [vmem:[#allocation2 + $0xd58] sm:$0xff]
    %v1807 = vld [vmem:[#allocation2 + $0xd68] sm:$0xff]
    %v1808 = vld [vmem:[#allocation2 + $0xd70] sm:$0xff]
    %v1809 = vld [vmem:[#allocation2 + $0xd78] sm:$0xff]
    %v1810 = vld [vmem:[#allocation2 + $0xd88] sm:$0xff]
    %v1811 = vld [vmem:[#allocation2 + $0xd90] sm:$0xff]
    %v1812 = vld [vmem:[#allocation2 + $0xd98] sm:$0xff]
    %v1813 = vld [vmem:[#allocation2 + $0xda8] sm:$0xff]
    %v1814 = vld [vmem:[#allocation2 + $0xdb0] sm:$0xff]
    %v1815 = vld [vmem:[#allocation2 + $0xdb8] sm:$0xff]
    %v1816 = vld [vmem:[#allocation2 + $0xdc8] sm:$0xff]
    %v1817 = vld [vmem:[#allocation2 + $0xdd0] sm:$0xff]
    %v1818 = vld [vmem:[#allocation2 + $0xdd8] sm:$0xff]
    %v1819 = vld [vmem:[#allocation2 + $0xde8] sm:$0xff]
    %v1820 = vld [vmem:[#allocation2 + $0xdf0] sm:$0xff]
    %v1821 = vld [vmem:[#allocation2 + $0xdf8] sm:$0xff]
    %v1822 = vld [vmem:[#allocation2 + $0xe08] sm:$0xff]
    %v1823 = vld [vmem:[#allocation2 + $0xe10] sm:$0xff]
    %v1824 = vld [vmem:[#allocation2 + $0xe18] sm:$0xff]
    %v1825 = vld [vmem:[#allocation2 + $0xe28] sm:$0xff]
    %v1826 = vld [vmem:[#allocation2 + $0xe30] sm:$0xff]
    %v1827 = vld [vmem:[#allocation2 + $0xe38] sm:$0xff]
    %v1828 = vld [vmem:[#allocation2 + $0xe48] sm:$0xff]
    %v1829 = vld [vmem:[#allocation2 + $0xe50] sm:$0xff]
    %v1830 = vld [vmem:[#allocation2 + $0xe58] sm:$0xff]
    %v1831 = vld [vmem:[#allocation2 + $0xe68] sm:$0xff]
    %v1832 = vld [vmem:[#allocation2 + $0xe70] sm:$0xff]
    %v1833 = vld [vmem:[#allocation2 + $0xe78] sm:$0xff]
    %v1834 = vld [vmem:[#allocation2 + $0xe88] sm:$0xff]
    %v1835 = vld [vmem:[#allocation2 + $0xe90] sm:$0xff]
    %v1836 = vld [vmem:[#allocation2 + $0xe98] sm:$0xff]
    %v1837 = vld [vmem:[#allocation2 + $0xea8] sm:$0xff]
    %v1838 = vld [vmem:[#allocation2 + $0xeb0] sm:$0xff]
    %v1839 = vld [vmem:[#allocation2 + $0xeb8] sm:$0xff]
    %v1840 = vld [vmem:[#allocation2 + $0xec8] sm:$0xff]
    %v1841 = vld [vmem:[#allocation2 + $0xed0] sm:$0xff]
    %v1842 = vld [vmem:[#allocation2 + $0xed8] sm:$0xff]
    %v1843 = vld [vmem:[#allocation2 + $0xee8] sm:$0xff]
    %v1844 = vld [vmem:[#allocation2 + $0xef0] sm:$0xff]
    %v1845 = vld [vmem:[#allocation2 + $0xef8] sm:$0xff]
    %s1846 = scalar_lea.vmem [#allocation9], 34
    %v1847 = vld [vmem:[%s1846] ss:$8 sm:$0x7]
    %v1849 = vlaneseq
    %v1850 = vshrl.u32 %v1849, 7
    %v1851 = vsub.s32 0, %v1850
    %v1852 = vrot.slane %v1847, %v1851
    %v1853 = vlaneseq
    %v1854 = vshrl.u32 %v1853, 7
    %v1855 = vsub.s32 1, %v1854
    %v1856 = vrot.slane %v1847, %v1855
    %v1857 = vlaneseq
    %v1858 = vshrl.u32 %v1857, 7
    %v1859 = vsub.s32 2, %v1858
    %v1860 = vrot.slane %v1847, %v1859
    %1864 = vmatprep.subr.bf16.mxu0 %v1799
    %1865 = vmatpush1.bf16.msra.mxu0 %v1798
    %1866 = vmatprep.subr.bf16.mxu0 %v1802
    %1867 = vmatpush1.bf16.msra.mxu0 %v1801
    %1868 = vmatprep.subr.bf16.mxu0 %v1805
    %1869 = vmatpush1.bf16.msra.mxu0 %v1804
    %1870 = vmatprep.subr.bf16.mxu0 %v1808
    %1871 = vmatpush1.bf16.msra.mxu0 %v1807
    %1872 = vmatprep.subr.bf16.mxu0 %v1811
    %1873 = vmatpush1.bf16.msra.mxu0 %v1810
    %1874 = vmatprep.subr.bf16.mxu0 %v1814
    %1875 = vmatpush1.bf16.msra.mxu0 %v1813
    %1876 = vmatprep.subr.bf16.mxu0 %v1817
    %1877 = vmatpush1.bf16.msra.mxu0 %v1816
    %1878 = vmatprep.subr.bf16.mxu0 %v1820
    %1879 = vmatpush1.bf16.msra.mxu0 %v1819
    %1880 = vmatprep.subr.bf16.mxu0 %v1823
    %1881 = vmatpush1.bf16.msra.mxu0 %v1822
    %1882 = vmatprep.subr.bf16.mxu0 %v1826
    %1883 = vmatpush1.bf16.msra.mxu0 %v1825
    %1884 = vmatprep.subr.bf16.mxu0 %v1829
    %1885 = vmatpush1.bf16.msra.mxu0 %v1828
    %1886 = vmatprep.subr.bf16.mxu0 %v1832
    %1887 = vmatpush1.bf16.msra.mxu0 %v1831
    %1888 = vmatprep.subr.bf16.mxu0 %v1835
    %1889 = vmatpush1.bf16.msra.mxu0 %v1834
    %1890 = vmatprep.subr.bf16.mxu0 %v1838
    %1891 = vmatpush1.bf16.msra.mxu0 %v1837
    %1892 = vmatprep.subr.bf16.mxu0 %v1841
    %1893 = vmatpush1.bf16.msra.mxu0 %v1840
    %1894 = vmatprep.subr.bf16.mxu0 %v1844
    %1895 = vmatpush1.bf16.msra.mxu0 %v1843
    %1896 = vmatprep.mubr.bf16.mxu0 %v1797
    %1897 = vmatmul.mubr.bf16.gmra.mrb[0].mxu0 %v1796
    %v1898 = vpop.f32.mrb[0].mxu0
    %v1899 = vadd.f32 %v1852, %v1898
    %v1900 = vpop.f32.mrb[0].mxu0
    %v1901 = vadd.f32 %v1856, %v1900
    %v1902 = vpop.f32.mrb[0].mxu0
    %v1903 = vpop.f32.mrb[0].mxu0
    %1904 = vdwg.mxu0
    %1905 = vmatprep.subr.bf16.mxu0 0
    %1906 = vmatpush1.bf16.msra.mxu0 %v1800
    %1907 = vmatprep.subr.bf16.mxu0 0
    %1908 = vmatpush1.bf16.msra.mxu0 %v1803
    %1909 = vmatprep.subr.bf16.mxu0 0
    %1910 = vmatpush1.bf16.msra.mxu0 %v1806
    %1911 = vmatprep.subr.bf16.mxu0 0
    %1912 = vmatpush1.bf16.msra.mxu0 %v1809
    %1913 = vmatprep.subr.bf16.mxu0 0
    %1914 = vmatpush1.bf16.msra.mxu0 %v1812
    %1915 = vmatprep.subr.bf16.mxu0 0
    %1916 = vmatpush1.bf16.msra.mxu0 %v1815
    %1917 = vmatprep.subr.bf16.mxu0 0
    %1918 = vmatpush1.bf16.msra.mxu0 %v1818
    %1919 = vmatprep.subr.bf16.mxu0 0
    %1920 = vmatpush1.bf16.msra.mxu0 %v1821
    %1921 = vmatprep.subr.bf16.mxu0 0
    %1922 = vmatpush1.bf16.msra.mxu0 %v1824
    %1923 = vmatprep.subr.bf16.mxu0 0
    %1924 = vmatpush1.bf16.msra.mxu0 %v1827
    %1925 = vmatprep.subr.bf16.mxu0 0
    %1926 = vmatpush1.bf16.msra.mxu0 %v1830
    %1927 = vmatprep.subr.bf16.mxu0 0
    %1928 = vmatpush1.bf16.msra.mxu0 %v1833
    %1929 = vmatprep.subr.bf16.mxu0 0
    %1930 = vmatpush1.bf16.msra.mxu0 %v1836
    %1931 = vmatprep.subr.bf16.mxu0 0
    %1932 = vmatpush1.bf16.msra.mxu0 %v1839
    %1933 = vmatprep.subr.bf16.mxu0 0
    %1934 = vmatpush1.bf16.msra.mxu0 %v1842
    %1935 = vmatprep.subr.bf16.mxu0 0
    %1936 = vmatpush1.bf16.msra.mxu0 %v1845
    %1937 = vmatprep.mubr.bf16.mxu0 %v1797
    %1938 = vmatmul.mubr.bf16.gmra.mrb[0].mxu0 %v1796
    %v1939 = vpop.f32.mrb[0].mxu0
    %v1940 = vadd.f32 %v1860, %v1939
    %v1941 = vpop.f32.mrb[0].mxu0
    %v1942 = vpop.f32.mrb[0].mxu0
    %v1943 = vpop.f32.mrb[0].mxu0
    %1944 = vdwg.mxu0
    %1945 = vst [vmem:[#allocation10] sm:$0xff] %v1899
    %1946 = vst [vmem:[#allocation10 + $0x8] sm:$0xff] %v1901
    %1947 = vst [vmem:[#allocation10 + $0x10] sm:$0xff] %v1940
    %1948 = vst [vmem:[#allocation11] sm:$0xff] %v1303
    // Predicated region
    $region26: #{tpu_custom_call.1} parent=1 // pred_check
      _
    $region27: #{tpu_custom_call.1} parent=1 // pred_check_branch
      %1950 = sbr.rel (0) target = $region29
    $region28: #{tpu_custom_call.1} parent=1 // pred_region
      %s1952 = ssub.s32 384, 384
      %1953 = vsyncadd [#allocation6], %s1952
      %s1955 = sshll.u32 [#allocation10], 4
      %s1956 = int_to_ptr.vmem [resolvable:$true] %s1955
      %1958 = dma.vmem_to_hbm [thread:$0]  %s1956, 384, %s4, [#allocation6]
    $region29: #{tpu_custom_call.1} parent=1 // pred_fallthru
      _
    // Predicated region
    $region30: #{tpu_custom_call.1} parent=1 // pred_check
      _
    $region31: #{tpu_custom_call.1} parent=1 // pred_check_branch
      %1960 = sbr.rel (0) target = $region33
    $region32: #{tpu_custom_call.1} parent=1 // pred_region
      %s1962 = ssub.s32 128, 128
      %1963 = vsyncadd [#allocation12], %s1962
      %s1965 = sshll.u32 [#allocation11], 4
      %s1966 = int_to_ptr.vmem [resolvable:$true] %s1965
      %1968 = dma.vmem_to_hbm [thread:$0]  %s1966, 128, %s5, [#allocation12]
    $region33: #{tpu_custom_call.1} parent=1 // pred_fallthru
      _
    // Predicated region
    $region34: #{tpu_custom_call.1} parent=1 // pred_check
      _
    $region35: #{tpu_custom_call.1} parent=1 // pred_check_branch
      %1970 = sbr.rel (0) target = $region37
    $region36: #{tpu_custom_call.1} parent=1 // pred_region
      %1971 = dma.done [#allocation6], 384
    $region37: #{tpu_custom_call.1} parent=1 // pred_fallthru
      _
    // Predicated region
    $region38: #{tpu_custom_call.1} parent=1 // pred_check
      _
    $region39: #{tpu_custom_call.1} parent=1 // pred_check_branch
      %1973 = sbr.rel (0) target = $region41
    $region40: #{tpu_custom_call.1} parent=1 // pred_region
      %1974 = dma.done [#allocation12], 128
    $region41: #{tpu_custom_call.1} parent=1 // pred_fallthru
      _
    %1975 = vsyncpa [#allocation5], 1
    %1976 = vsyncpa [#allocation8], 1
    %1977 = vsyncpa [#allocation6], 1
    %1978 = vsyncpa [#allocation12], 1
  %1979 = vsyncmov [#allocation3]
  %s1980 = vpop.sfrf %1979
  %p1981 = scmp.eq.s32.totalorder %s1980, 0
  %p1982 = pneg %p1981
  %1984 = shalt.err (%p1982)
  %s1985 = scalar_lea.sflag [#allocation3], 1
  %1986 = vsyncmov %s1985
  %s1987 = vpop.sfrf %1986
  %p1988 = scmp.eq.s32.totalorder %s1987, 0
  %p1989 = pneg %p1988
  %1991 = shalt.err (%p1989)
  %s1992 = scalar_lea.sflag [#allocation3], 2
  %1993 = vsyncmov %s1992
  %s1994 = vpop.sfrf %1993
  %p1995 = scmp.eq.s32.totalorder %s1994, 0
  %p1996 = pneg %p1995
  %1998 = shalt.err (%p1996)
  %s1999 = scalar_lea.sflag [#allocation3], 3
  %2000 = vsyncmov %s1999
  %s2001 = vpop.sfrf %2000
  %p2002 = scmp.eq.s32.totalorder %s2001, 0
  %p2003 = pneg %p2002
  %2005 = shalt.err (%p2003)
  %s2006 = scalar_lea.sflag [#allocation3], 4
  %2007 = vsyncmov %s2006
  %s2008 = vpop.sfrf %2007
  %p2009 = scmp.eq.s32.totalorder %s2008, 0
  %p2010 = pneg %p2009
  %2012 = shalt.err (%p2010)
  %s2013 = scalar_lea.sflag [#allocation3], 5
  %2014 = vsyncmov %s2013
  %s2015 = vpop.sfrf %2014
  %p2016 = scmp.eq.s32.totalorder %s2015, 0
  %p2017 = pneg %p2016
  %2019 = shalt.err (%p2017)
  %s2020 = scalar_lea.sflag [#allocation3], 6
  %2021 = vsyncmov %s2020
  %s2022 = vpop.sfrf %2021
  %p2023 = scmp.eq.s32.totalorder %s2022, 0
  %p2024 = pneg %p2023
  %2026 = shalt.err (%p2024)
  %s2027 = scalar_lea.sflag [#allocation3], 7
  %2028 = vsyncmov %s2027
  %s2029 = vpop.sfrf %2028
  %p2030 = scmp.eq.s32.totalorder %s2029, 0
  %p2031 = pneg %p2030
  %2033 = shalt.err (%p2031)

</llo_original>
